<compile_context>
chip_gen: v7x
topology: tpu7x:2x2x1
jax: 0.10.0
libtpu: 0.0.40
codegen_flags: <defaults>
</compile_context>

<pallas_src>
import jax
import jax.numpy as jnp
import numpy as np
from jax.experimental import pallas as pl
from jax.experimental.pallas import tpu as pltpu


# ----------------------------- Pallas kernel ---------------------------------

def _rnn_encoder_kernel(lens_ref,   # VMEM (B, 1)     int32  sequence lengths
                        emb_ref,    # VMEM (S*B, E)   f32    embedded tokens
                        wih_ref,    # VMEM (E, 4H)    f32    W_ih^T
                        whh_ref,    # VMEM (H, 4H)    f32    W_hh^T
                        bias_ref,   # VMEM (1, 4H)    f32    b_ih + b_hh
                        out_ref,    # VMEM (S, B, H)  f32    outputs
                        hn_ref,     # VMEM (1, B, H)  f32    final h
                        cn_ref,     # VMEM (1, B, H)  f32    final c
                        gx_ref):    # VMEM (S*B, 4H)  f32    scratch: input projection
    S, B, H = out_ref.shape

    # Fused input projection: all S time steps in one (S*B,E)x(E,4H) MXU matmul.
    gx_ref[...] = (jnp.dot(emb_ref[...], wih_ref[...],
                           preferred_element_type=jnp.float32)
                   + bias_ref[...])

    whh = whh_ref[...]                                   # (H, 4H), loop-invariant

    # lengths -> (B, H) once; hoisted so the broadcast is not re-emitted per step.
    lens_bh = jnp.broadcast_to(lens_ref[...], (B, H))    # int32

    h = jnp.zeros((B, H), jnp.float32)
    c = jnp.zeros((B, H), jnp.float32)

    # S is a static Python int -> the time loop is fully unrolled; h/c are carried
    # in vregs (no scratch round-trips, no per-step grid/pipeline overhead).
    for t in range(S):
        # Gates in PyTorch order [i, f, g, o]; 4H = 128 -> lane aligned.
        gates = gx_ref[pl.ds(t * B, B), :] + jnp.dot(
            h, whh, preferred_element_type=jnp.float32)  # (B, 4H)

        # Full-width activations: 2 EUP pushes cover all four gate groups.
        sig = jax.nn.sigmoid(gates)
        tnh = jnp.tanh(gates)
        i_g = sig[:, 0 * H:1 * H]
        f_g = sig[:, 1 * H:2 * H]
        g_g = tnh[:, 2 * H:3 * H]
        o_g = sig[:, 3 * H:4 * H]

        c_new = f_g * c + i_g * g_g
        h_new = o_g * jnp.tanh(c_new)

        valid = lens_bh > t                              # (B, H) bool, t static
        out_ref[t] = jnp.where(valid, h_new, 0.0)        # zero padded positions
        h = jnp.where(valid, h_new, h)                   # freeze state past length
        c = jnp.where(valid, c_new, c)

    hn_ref[0] = h
    cn_ref[0] = c


# ------------------------------ JAX wrapper ----------------------------------

@jax.jit
def rnn_encoder_forward(tokens, lengths, emb_table, w_ih, w_hh, b_ih, b_hh):
    """
    tokens:    [S, B, 1] int32  (sparse indices, nfeat = 1)
    lengths:   [B]        int32 (must be >= 1, like pack_padded_sequence requires)
    emb_table: [V, E]     f32
    w_ih:      [4H, E]    f32   (PyTorch weight_ih_l0)
    w_hh:      [4H, H]    f32   (PyTorch weight_hh_l0)
    b_ih,b_hh: [4H]       f32
    Returns ((h_n, c_n), outputs) with h_n/c_n [1, B, H] and outputs [S, B, H].
    """
    S, B, _ = tokens.shape
    E = emb_table.shape[1]
    H = w_hh.shape[1]
    G = 4 * H

    # Embedding lookup (gather) — glue, kept in plain JAX.
    # TODO(synk): optionally move the gather in-kernel (emb_table is only ~3 KB).
    emb = jnp.take(emb_table, tokens[:, :, 0], axis=0)            # [S, B, E]
    emb2d = emb.reshape(S * B, E)                                 # sublane-dense slab

    wih_t = jnp.transpose(w_ih)                                   # [E, 4H]
    whh_t = jnp.transpose(w_hh)                                   # [H, 4H]
    bias = (b_ih + b_hh).reshape(1, G)                            # [1, 4H]
    lens2d = lengths.astype(jnp.int32).reshape(B, 1)              # [B, 1]
    # NOTE: zero-length sequences are outside the reference contract
    # (PyTorch pack_padded_sequence rejects them); h_n/c_n would come back as zeros.

    grid_spec = pltpu.PrefetchScalarGridSpec(
        num_scalar_prefetch=0,
        grid=(1,),                                                # single invocation
        in_specs=[
            pl.BlockSpec((B, 1), lambda i: (0, 0)),               # lengths
            pl.BlockSpec((S * B, E), lambda i: (0, 0)),           # emb
            pl.BlockSpec((E, G), lambda i: (0, 0)),               # W_ih^T
            pl.BlockSpec((H, G), lambda i: (0, 0)),               # W_hh^T
            pl.BlockSpec((1, G), lambda i: (0, 0)),               # b_ih + b_hh
        ],
        out_specs=[
            pl.BlockSpec((S, B, H), lambda i: (0, 0, 0)),         # outputs
            pl.BlockSpec((1, B, H), lambda i: (0, 0, 0)),         # h_n
            pl.BlockSpec((1, B, H), lambda i: (0, 0, 0)),         # c_n
        ],
        scratch_shapes=[pltpu.VMEM((S * B, G), jnp.float32)],     # gates_x scratch
    )

    outputs, h_n, c_n = pl.pallas_call(
        _rnn_encoder_kernel,
        grid_spec=grid_spec,
        out_shape=(
            jax.ShapeDtypeStruct((S, B, H), jnp.float32),
            jax.ShapeDtypeStruct((1, B, H), jnp.float32),
            jax.ShapeDtypeStruct((1, B, H), jnp.float32),
        ),
        compiler_params=pltpu.CompilerParams(
            dimension_semantics=("arbitrary",),                   # recurrence is sequential
        ),
    )(lens2d, emb2d, wih_t, whh_t, bias)

    return (h_n, c_n), outputs


# -------------------------- Pure-JAX reference -------------------------------

def rnn_encoder_reference(tokens, lengths, emb_table, w_ih, w_hh, b_ih, b_hh):
    S, B, _ = tokens.shape
    H = w_hh.shape[1]
    emb = jnp.take(emb_table, tokens[:, :, 0], axis=0)  # [S, B, E]

    def step(carry, xs):
        h, c = carry
        x_t, t = xs
        gates = x_t @ w_ih.T + h @ w_hh.T + b_ih + b_hh
        i = jax.nn.sigmoid(gates[:, 0 * H:1 * H])
        f = jax.nn.sigmoid(gates[:, 1 * H:2 * H])
        g = jnp.tanh(gates[:, 2 * H:3 * H])
        o = jax.nn.sigmoid(gates[:, 3 * H:4 * H])
        c_new = f * c + i * g
        h_new = o * jnp.tanh(c_new)
        valid = (lengths > t)[:, None]
        h = jnp.where(valid, h_new, h)
        c = jnp.where(valid, c_new, c)
        out = jnp.where(valid, h_new, 0.0)
        return (h, c), out

    (h_n, c_n), outs = jax.lax.scan(
        step,
        (jnp.zeros((B, H), jnp.float32), jnp.zeros((B, H), jnp.float32)),
        (emb, jnp.arange(S)),
    )
    return (h_n[None], c_n[None]), outs


# ---------------------------------- main --------------------------------------

if __name__ == "__main__":
    S, B, E, H, V = 8, 4, 16, 32, 50   # seq, batch, emb_dim, hidden, vocab

    key = jax.random.PRNGKey(0)
    k_tok, k_emb, k_wih, k_whh, k_bih, k_bhh = jax.random.split(key, 6)

    tokens = jax.random.randint(k_tok, (S, B, 1), 0, V, dtype=jnp.int32)
    lengths = jnp.array([8, 6, 5, 3], dtype=jnp.int32)          # sorted desc, like pack()

    scale = 1.0 / np.sqrt(H)
    emb_table = jax.random.normal(k_emb, (V, E), jnp.float32) * 0.1
    w_ih = jax.random.uniform(k_wih, (4 * H, E), jnp.float32, -scale, scale)
    w_hh = jax.random.uniform(k_whh, (4 * H, H), jnp.float32, -scale, scale)
    b_ih = jax.random.uniform(k_bih, (4 * H,), jnp.float32, -scale, scale)
    b_hh = jax.random.uniform(k_bhh, (4 * H,), jnp.float32, -scale, scale)

    (h_n, c_n), outputs = rnn_encoder_forward(
        tokens, lengths, emb_table, w_ih, w_hh, b_ih, b_hh)
    jax.block_until_ready((h_n, c_n, outputs))

    (h_ref, c_ref), out_ref = rnn_encoder_reference(
        tokens, lengths, emb_table, w_ih, w_hh, b_ih, b_hh)

    # Tolerance accommodates MXU fast-path (bf16-pass) vs f32 rounding differences
    # between the in-kernel dots and the XLA reference dots across the 8-step recurrence.
    np.testing.assert_allclose(np.asarray(outputs), np.asarray(out_ref), atol=5e-3, rtol=5e-3)
    np.testing.assert_allclose(np.asarray(h_n), np.asarray(h_ref), atol=5e-3, rtol=5e-3)
    np.testing.assert_allclose(np.asarray(c_n), np.asarray(c_ref), atol=5e-3, rtol=5e-3)

    print("KERNEL_OK")
</pallas_src>

<mosaic_0001>
module attributes {stable_mosaic.version = 11 : i64} {
  func.func @_rnn_encoder_kernel(%arg0: i32, %arg1: memref<4x1xi32, #tpu.memory_space<vmem>>, %arg2: memref<32x16xf32, #tpu.memory_space<vmem>>, %arg3: memref<16x128xf32, #tpu.memory_space<vmem>>, %arg4: memref<32x128xf32, #tpu.memory_space<vmem>>, %arg5: memref<1x128xf32, #tpu.memory_space<vmem>>, %arg6: memref<8x4x32xf32, #tpu.memory_space<vmem>>, %arg7: memref<1x4x32xf32, #tpu.memory_space<vmem>>, %arg8: memref<1x4x32xf32, #tpu.memory_space<vmem>>, %arg9: memref<32x128xf32, #tpu.memory_space<vmem>>) attributes {dimension_semantics = [#tpu.dimension_semantics<arbitrary>], iteration_bounds = array<i64: 1>, scalar_prefetch = 0 : i64, scratch_operands = 1 : i64, tpu.core_type = #tpu.core_type<tc>, window_params = [{pipeline_mode = #tpu.pipeline_mode<synchronous>, transform_indices = @transform_0, window_bounds = array<i64: 4, 1>}, {pipeline_mode = #tpu.pipeline_mode<synchronous>, transform_indices = @transform_1, window_bounds = array<i64: 32, 16>}, {pipeline_mode = #tpu.pipeline_mode<synchronous>, transform_indices = @transform_2, window_bounds = array<i64: 16, 128>}, {pipeline_mode = #tpu.pipeline_mode<synchronous>, transform_indices = @transform_3, window_bounds = array<i64: 32, 128>}, {pipeline_mode = #tpu.pipeline_mode<synchronous>, transform_indices = @transform_4, window_bounds = array<i64: 1, 128>}, {pipeline_mode = #tpu.pipeline_mode<synchronous>, transform_indices = @transform_5, window_bounds = array<i64: 8, 4, 32>}, {pipeline_mode = #tpu.pipeline_mode<synchronous>, transform_indices = @transform_6, window_bounds = array<i64: 1, 4, 32>}, {pipeline_mode = #tpu.pipeline_mode<synchronous>, transform_indices = @transform_7, window_bounds = array<i64: 1, 4, 32>}]} {
    %c0 = arith.constant 0 : index
    %c0_0 = arith.constant 0 : index
    %0 = vector.load %arg2[%c0, %c0_0] : memref<32x16xf32, #tpu.memory_space<vmem>>, vector<32x16xf32>
    %c0_1 = arith.constant 0 : index
    %c0_2 = arith.constant 0 : index
    %1 = vector.load %arg3[%c0_1, %c0_2] : memref<16x128xf32, #tpu.memory_space<vmem>>, vector<16x128xf32>
    %cst = arith.constant dense<0.000000e+00> : vector<32x128xf32>
    %2 = tpu.matmul %0, %1, %cst {dimension_numbers = #tpu.dot_dimension_numbers<[1], [0], [0], [1], [0, 0, 1, 1], [], []>} : vector<32x16xf32>, vector<16x128xf32>, vector<32x128xf32> -> vector<32x128xf32>
    %c0_3 = arith.constant 0 : index
    %c0_4 = arith.constant 0 : index
    %3 = vector.load %arg5[%c0_3, %c0_4] : memref<1x128xf32, #tpu.memory_space<vmem>>, vector<1x128xf32>
    %4 = vector.broadcast %3 : vector<1x128xf32> to vector<32x128xf32>
    %5 = arith.addf %2, %4 : vector<32x128xf32>
    %c0_5 = arith.constant 0 : index
    %c0_6 = arith.constant 0 : index
    %6 = vector.load %arg9[%c0_5, %c0_6] : memref<32x128xf32, #tpu.memory_space<vmem>>, vector<32x128xf32>
    tpu.vector_store %arg9[%c0_5, %c0_6], %5 {strides = array<i32>} : memref<32x128xf32, #tpu.memory_space<vmem>>, vector<32x128xf32>,
    %c0_7 = arith.constant 0 : index
    %c0_8 = arith.constant 0 : index
    %7 = vector.load %arg4[%c0_7, %c0_8] : memref<32x128xf32, #tpu.memory_space<vmem>>, vector<32x128xf32>
    %c0_9 = arith.constant 0 : index
    %c0_10 = arith.constant 0 : index
    %8 = vector.load %arg1[%c0_9, %c0_10] : memref<4x1xi32, #tpu.memory_space<vmem>>, vector<4x1xi32>
    %9 = vector.shape_cast %8 : vector<4x1xi32> to vector<4x1xi32>
    %10 = vector.broadcast %9 : vector<4x1xi32> to vector<4x32xi32>
    %cst_11 = arith.constant 0.000000e+00 : f32
    %11 = vector.broadcast %cst_11 : f32 to vector<4x32xf32>
    %cst_12 = arith.constant 0.000000e+00 : f32
    %12 = vector.broadcast %cst_12 : f32 to vector<4x32xf32>
    %c0_13 = arith.constant 0 : index
    %c0_14 = arith.constant 0 : index
    %13 = vector.load %arg9[%c0_13, %c0_14] : memref<32x128xf32, #tpu.memory_space<vmem>>, vector<4x128xf32>
    %cst_15 = arith.constant dense<0.000000e+00> : vector<4x128xf32>
    %14 = tpu.matmul %11, %7, %cst_15 {dimension_numbers = #tpu.dot_dimension_numbers<[1], [0], [0], [1], [0, 0, 1, 1], [], []>} : vector<4x32xf32>, vector<32x128xf32>, vector<4x128xf32> -> vector<4x128xf32>
    %15 = arith.addf %13, %14 : vector<4x128xf32>
    %16 = arith.negf %15 : vector<4x128xf32>
    %17 = math.exp %16 : vector<4x128xf32>
    %cst_16 = arith.constant 1.000000e+00 : f32
    %18 = vector.broadcast %cst_16 : f32 to vector<4x128xf32>
    %19 = arith.addf %18, %17 : vector<4x128xf32>
    %20 = arith.divf %18, %19 : vector<4x128xf32>
    %21 = math.tanh %15 : vector<4x128xf32>
    %22 = vector.extract_strided_slice %20 {offsets = [0, 0], sizes = [4, 32], strides = [1, 1]} : vector<4x128xf32> to vector<4x32xf32>
    %23 = vector.extract_strided_slice %20 {offsets = [0, 32], sizes = [4, 32], strides = [1, 1]} : vector<4x128xf32> to vector<4x32xf32>
    %24 = vector.extract_strided_slice %21 {offsets = [0, 64], sizes = [4, 32], strides = [1, 1]} : vector<4x128xf32> to vector<4x32xf32>
    %25 = vector.extract_strided_slice %20 {offsets = [0, 96], sizes = [4, 32], strides = [1, 1]} : vector<4x128xf32> to vector<4x32xf32>
    %26 = arith.mulf %23, %12 : vector<4x32xf32>
    %27 = arith.mulf %22, %24 : vector<4x32xf32>
    %28 = arith.addf %26, %27 : vector<4x32xf32>
    %29 = math.tanh %28 : vector<4x32xf32>
    %30 = arith.mulf %25, %29 : vector<4x32xf32>
    %c0_i32 = arith.constant 0 : i32
    %31 = vector.broadcast %c0_i32 : i32 to vector<4x32xi32>
    %32 = arith.cmpi sgt, %10, %31 : vector<4x32xi32>
    %cst_17 = arith.constant 0.000000e+00 : f32
    %33 = vector.broadcast %cst_17 : f32 to vector<4x32xf32>
    %34 = arith.select %32, %30, %33 : vector<4x32xi1>, vector<4x32xf32>
    %c0_18 = arith.constant 0 : index
    %c0_19 = arith.constant 0 : index
    %c0_20 = arith.constant 0 : index
    %35 = vector.load %arg6[%c0_18, %c0_19, %c0_20] : memref<8x4x32xf32, #tpu.memory_space<vmem>>, vector<1x4x32xf32>
    %36 = vector.shape_cast %35 : vector<1x4x32xf32> to vector<4x32xf32>
    %37 = vector.shape_cast %34 : vector<4x32xf32> to vector<1x4x32xf32>
    tpu.vector_store %arg6[%c0_18, %c0_19, %c0_20], %37 {strides = array<i32>} : memref<8x4x32xf32, #tpu.memory_space<vmem>>, vector<1x4x32xf32>,
    %38 = arith.select %32, %30, %11 : vector<4x32xi1>, vector<4x32xf32>
    %39 = arith.select %32, %28, %12 : vector<4x32xi1>, vector<4x32xf32>
    %c4 = arith.constant 4 : index
    %c0_21 = arith.constant 0 : index
    %40 = vector.load %arg9[%c4, %c0_21] : memref<32x128xf32, #tpu.memory_space<vmem>>, vector<4x128xf32>
    %cst_22 = arith.constant dense<0.000000e+00> : vector<4x128xf32>
    %41 = tpu.matmul %38, %7, %cst_22 {dimension_numbers = #tpu.dot_dimension_numbers<[1], [0], [0], [1], [0, 0, 1, 1], [], []>} : vector<4x32xf32>, vector<32x128xf32>, vector<4x128xf32> -> vector<4x128xf32>
    %42 = arith.addf %40, %41 : vector<4x128xf32>
    %43 = arith.negf %42 : vector<4x128xf32>
    %44 = math.exp %43 : vector<4x128xf32>
    %cst_23 = arith.constant 1.000000e+00 : f32
    %45 = vector.broadcast %cst_23 : f32 to vector<4x128xf32>
    %46 = arith.addf %45, %44 : vector<4x128xf32>
    %47 = arith.divf %45, %46 : vector<4x128xf32>
    %48 = math.tanh %42 : vector<4x128xf32>
    %49 = vector.extract_strided_slice %47 {offsets = [0, 0], sizes = [4, 32], strides = [1, 1]} : vector<4x128xf32> to vector<4x32xf32>
    %50 = vector.extract_strided_slice %47 {offsets = [0, 32], sizes = [4, 32], strides = [1, 1]} : vector<4x128xf32> to vector<4x32xf32>
    %51 = vector.extract_strided_slice %48 {offsets = [0, 64], sizes = [4, 32], strides = [1, 1]} : vector<4x128xf32> to vector<4x32xf32>
    %52 = vector.extract_strided_slice %47 {offsets = [0, 96], sizes = [4, 32], strides = [1, 1]} : vector<4x128xf32> to vector<4x32xf32>
    %53 = arith.mulf %50, %39 : vector<4x32xf32>
    %54 = arith.mulf %49, %51 : vector<4x32xf32>
    %55 = arith.addf %53, %54 : vector<4x32xf32>
    %56 = math.tanh %55 : vector<4x32xf32>
    %57 = arith.mulf %52, %56 : vector<4x32xf32>
    %c1_i32 = arith.constant 1 : i32
    %58 = vector.broadcast %c1_i32 : i32 to vector<4x32xi32>
    %59 = arith.cmpi sgt, %10, %58 : vector<4x32xi32>
    %cst_24 = arith.constant 0.000000e+00 : f32
    %60 = vector.broadcast %cst_24 : f32 to vector<4x32xf32>
    %61 = arith.select %59, %57, %60 : vector<4x32xi1>, vector<4x32xf32>
    %c1 = arith.constant 1 : index
    %c0_25 = arith.constant 0 : index
    %c0_26 = arith.constant 0 : index
    %62 = vector.load %arg6[%c1, %c0_25, %c0_26] : memref<8x4x32xf32, #tpu.memory_space<vmem>>, vector<1x4x32xf32>
    %63 = vector.shape_cast %62 : vector<1x4x32xf32> to vector<4x32xf32>
    %64 = vector.shape_cast %61 : vector<4x32xf32> to vector<1x4x32xf32>
    tpu.vector_store %arg6[%c1, %c0_25, %c0_26], %64 {strides = array<i32>} : memref<8x4x32xf32, #tpu.memory_space<vmem>>, vector<1x4x32xf32>,
    %65 = arith.select %59, %57, %38 : vector<4x32xi1>, vector<4x32xf32>
    %66 = arith.select %59, %55, %39 : vector<4x32xi1>, vector<4x32xf32>
    %c8 = arith.constant 8 : index
    %c0_27 = arith.constant 0 : index
    %67 = vector.load %arg9[%c8, %c0_27] : memref<32x128xf32, #tpu.memory_space<vmem>>, vector<4x128xf32>
    %cst_28 = arith.constant dense<0.000000e+00> : vector<4x128xf32>
    %68 = tpu.matmul %65, %7, %cst_28 {dimension_numbers = #tpu.dot_dimension_numbers<[1], [0], [0], [1], [0, 0, 1, 1], [], []>} : vector<4x32xf32>, vector<32x128xf32>, vector<4x128xf32> -> vector<4x128xf32>
    %69 = arith.addf %67, %68 : vector<4x128xf32>
    %70 = arith.negf %69 : vector<4x128xf32>
    %71 = math.exp %70 : vector<4x128xf32>
    %cst_29 = arith.constant 1.000000e+00 : f32
    %72 = vector.broadcast %cst_29 : f32 to vector<4x128xf32>
    %73 = arith.addf %72, %71 : vector<4x128xf32>
    %74 = arith.divf %72, %73 : vector<4x128xf32>
    %75 = math.tanh %69 : vector<4x128xf32>
    %76 = vector.extract_strided_slice %74 {offsets = [0, 0], sizes = [4, 32], strides = [1, 1]} : vector<4x128xf32> to vector<4x32xf32>
    %77 = vector.extract_strided_slice %74 {offsets = [0, 32], sizes = [4, 32], strides = [1, 1]} : vector<4x128xf32> to vector<4x32xf32>
    %78 = vector.extract_strided_slice %75 {offsets = [0, 64], sizes = [4, 32], strides = [1, 1]} : vector<4x128xf32> to vector<4x32xf32>
    %79 = vector.extract_strided_slice %74 {offsets = [0, 96], sizes = [4, 32], strides = [1, 1]} : vector<4x128xf32> to vector<4x32xf32>
    %80 = arith.mulf %77, %66 : vector<4x32xf32>
    %81 = arith.mulf %76, %78 : vector<4x32xf32>
    %82 = arith.addf %80, %81 : vector<4x32xf32>
    %83 = math.tanh %82 : vector<4x32xf32>
    %84 = arith.mulf %79, %83 : vector<4x32xf32>
    %c2_i32 = arith.constant 2 : i32
    %85 = vector.broadcast %c2_i32 : i32 to vector<4x32xi32>
    %86 = arith.cmpi sgt, %10, %85 : vector<4x32xi32>
    %cst_30 = arith.constant 0.000000e+00 : f32
    %87 = vector.broadcast %cst_30 : f32 to vector<4x32xf32>
    %88 = arith.select %86, %84, %87 : vector<4x32xi1>, vector<4x32xf32>
    %c2 = arith.constant 2 : index
    %c0_31 = arith.constant 0 : index
    %c0_32 = arith.constant 0 : index
    %89 = vector.load %arg6[%c2, %c0_31, %c0_32] : memref<8x4x32xf32, #tpu.memory_space<vmem>>, vector<1x4x32xf32>
    %90 = vector.shape_cast %89 : vector<1x4x32xf32> to vector<4x32xf32>
    %91 = vector.shape_cast %88 : vector<4x32xf32> to vector<1x4x32xf32>
    tpu.vector_store %arg6[%c2, %c0_31, %c0_32], %91 {strides = array<i32>} : memref<8x4x32xf32, #tpu.memory_space<vmem>>, vector<1x4x32xf32>,
    %92 = arith.select %86, %84, %65 : vector<4x32xi1>, vector<4x32xf32>
    %93 = arith.select %86, %82, %66 : vector<4x32xi1>, vector<4x32xf32>
    %c12 = arith.constant 12 : index
    %c0_33 = arith.constant 0 : index
    %94 = vector.load %arg9[%c12, %c0_33] : memref<32x128xf32, #tpu.memory_space<vmem>>, vector<4x128xf32>
    %cst_34 = arith.constant dense<0.000000e+00> : vector<4x128xf32>
    %95 = tpu.matmul %92, %7, %cst_34 {dimension_numbers = #tpu.dot_dimension_numbers<[1], [0], [0], [1], [0, 0, 1, 1], [], []>} : vector<4x32xf32>, vector<32x128xf32>, vector<4x128xf32> -> vector<4x128xf32>
    %96 = arith.addf %94, %95 : vector<4x128xf32>
    %97 = arith.negf %96 : vector<4x128xf32>
    %98 = math.exp %97 : vector<4x128xf32>
    %cst_35 = arith.constant 1.000000e+00 : f32
    %99 = vector.broadcast %cst_35 : f32 to vector<4x128xf32>
    %100 = arith.addf %99, %98 : vector<4x128xf32>
    %101 = arith.divf %99, %100 : vector<4x128xf32>
    %102 = math.tanh %96 : vector<4x128xf32>
    %103 = vector.extract_strided_slice %101 {offsets = [0, 0], sizes = [4, 32], strides = [1, 1]} : vector<4x128xf32> to vector<4x32xf32>
    %104 = vector.extract_strided_slice %101 {offsets = [0, 32], sizes = [4, 32], strides = [1, 1]} : vector<4x128xf32> to vector<4x32xf32>
    %105 = vector.extract_strided_slice %102 {offsets = [0, 64], sizes = [4, 32], strides = [1, 1]} : vector<4x128xf32> to vector<4x32xf32>
    %106 = vector.extract_strided_slice %101 {offsets = [0, 96], sizes = [4, 32], strides = [1, 1]} : vector<4x128xf32> to vector<4x32xf32>
    %107 = arith.mulf %104, %93 : vector<4x32xf32>
    %108 = arith.mulf %103, %105 : vector<4x32xf32>
    %109 = arith.addf %107, %108 : vector<4x32xf32>
    %110 = math.tanh %109 : vector<4x32xf32>
    %111 = arith.mulf %106, %110 : vector<4x32xf32>
    %c3_i32 = arith.constant 3 : i32
    %112 = vector.broadcast %c3_i32 : i32 to vector<4x32xi32>
    %113 = arith.cmpi sgt, %10, %112 : vector<4x32xi32>
    %cst_36 = arith.constant 0.000000e+00 : f32
    %114 = vector.broadcast %cst_36 : f32 to vector<4x32xf32>
    %115 = arith.select %113, %111, %114 : vector<4x32xi1>, vector<4x32xf32>
    %c3 = arith.constant 3 : index
    %c0_37 = arith.constant 0 : index
    %c0_38 = arith.constant 0 : index
    %116 = vector.load %arg6[%c3, %c0_37, %c0_38] : memref<8x4x32xf32, #tpu.memory_space<vmem>>, vector<1x4x32xf32>
    %117 = vector.shape_cast %116 : vector<1x4x32xf32> to vector<4x32xf32>
    %118 = vector.shape_cast %115 : vector<4x32xf32> to vector<1x4x32xf32>
    tpu.vector_store %arg6[%c3, %c0_37, %c0_38], %118 {strides = array<i32>} : memref<8x4x32xf32, #tpu.memory_space<vmem>>, vector<1x4x32xf32>,
    %119 = arith.select %113, %111, %92 : vector<4x32xi1>, vector<4x32xf32>
    %120 = arith.select %113, %109, %93 : vector<4x32xi1>, vector<4x32xf32>
    %c16 = arith.constant 16 : index
    %c0_39 = arith.constant 0 : index
    %121 = vector.load %arg9[%c16, %c0_39] : memref<32x128xf32, #tpu.memory_space<vmem>>, vector<4x128xf32>
    %cst_40 = arith.constant dense<0.000000e+00> : vector<4x128xf32>
    %122 = tpu.matmul %119, %7, %cst_40 {dimension_numbers = #tpu.dot_dimension_numbers<[1], [0], [0], [1], [0, 0, 1, 1], [], []>} : vector<4x32xf32>, vector<32x128xf32>, vector<4x128xf32> -> vector<4x128xf32>
    %123 = arith.addf %121, %122 : vector<4x128xf32>
    %124 = arith.negf %123 : vector<4x128xf32>
    %125 = math.exp %124 : vector<4x128xf32>
    %cst_41 = arith.constant 1.000000e+00 : f32
    %126 = vector.broadcast %cst_41 : f32 to vector<4x128xf32>
    %127 = arith.addf %126, %125 : vector<4x128xf32>
    %128 = arith.divf %126, %127 : vector<4x128xf32>
    %129 = math.tanh %123 : vector<4x128xf32>
    %130 = vector.extract_strided_slice %128 {offsets = [0, 0], sizes = [4, 32], strides = [1, 1]} : vector<4x128xf32> to vector<4x32xf32>
    %131 = vector.extract_strided_slice %128 {offsets = [0, 32], sizes = [4, 32], strides = [1, 1]} : vector<4x128xf32> to vector<4x32xf32>
    %132 = vector.extract_strided_slice %129 {offsets = [0, 64], sizes = [4, 32], strides = [1, 1]} : vector<4x128xf32> to vector<4x32xf32>
    %133 = vector.extract_strided_slice %128 {offsets = [0, 96], sizes = [4, 32], strides = [1, 1]} : vector<4x128xf32> to vector<4x32xf32>
    %134 = arith.mulf %131, %120 : vector<4x32xf32>
    %135 = arith.mulf %130, %132 : vector<4x32xf32>
    %136 = arith.addf %134, %135 : vector<4x32xf32>
    %137 = math.tanh %136 : vector<4x32xf32>
    %138 = arith.mulf %133, %137 : vector<4x32xf32>
    %c4_i32 = arith.constant 4 : i32
    %139 = vector.broadcast %c4_i32 : i32 to vector<4x32xi32>
    %140 = arith.cmpi sgt, %10, %139 : vector<4x32xi32>
    %cst_42 = arith.constant 0.000000e+00 : f32
    %141 = vector.broadcast %cst_42 : f32 to vector<4x32xf32>
    %142 = arith.select %140, %138, %141 : vector<4x32xi1>, vector<4x32xf32>
    %c4_43 = arith.constant 4 : index
    %c0_44 = arith.constant 0 : index
    %c0_45 = arith.constant 0 : index
    %143 = vector.load %arg6[%c4_43, %c0_44, %c0_45] : memref<8x4x32xf32, #tpu.memory_space<vmem>>, vector<1x4x32xf32>
    %144 = vector.shape_cast %143 : vector<1x4x32xf32> to vector<4x32xf32>
    %145 = vector.shape_cast %142 : vector<4x32xf32> to vector<1x4x32xf32>
    tpu.vector_store %arg6[%c4_43, %c0_44, %c0_45], %145 {strides = array<i32>} : memref<8x4x32xf32, #tpu.memory_space<vmem>>, vector<1x4x32xf32>,
    %146 = arith.select %140, %138, %119 : vector<4x32xi1>, vector<4x32xf32>
    %147 = arith.select %140, %136, %120 : vector<4x32xi1>, vector<4x32xf32>
    %c20 = arith.constant 20 : index
    %c0_46 = arith.constant 0 : index
    %148 = vector.load %arg9[%c20, %c0_46] : memref<32x128xf32, #tpu.memory_space<vmem>>, vector<4x128xf32>
    %cst_47 = arith.constant dense<0.000000e+00> : vector<4x128xf32>
    %149 = tpu.matmul %146, %7, %cst_47 {dimension_numbers = #tpu.dot_dimension_numbers<[1], [0], [0], [1], [0, 0, 1, 1], [], []>} : vector<4x32xf32>, vector<32x128xf32>, vector<4x128xf32> -> vector<4x128xf32>
    %150 = arith.addf %148, %149 : vector<4x128xf32>
    %151 = arith.negf %150 : vector<4x128xf32>
    %152 = math.exp %151 : vector<4x128xf32>
    %cst_48 = arith.constant 1.000000e+00 : f32
    %153 = vector.broadcast %cst_48 : f32 to vector<4x128xf32>
    %154 = arith.addf %153, %152 : vector<4x128xf32>
    %155 = arith.divf %153, %154 : vector<4x128xf32>
    %156 = math.tanh %150 : vector<4x128xf32>
    %157 = vector.extract_strided_slice %155 {offsets = [0, 0], sizes = [4, 32], strides = [1, 1]} : vector<4x128xf32> to vector<4x32xf32>
    %158 = vector.extract_strided_slice %155 {offsets = [0, 32], sizes = [4, 32], strides = [1, 1]} : vector<4x128xf32> to vector<4x32xf32>
    %159 = vector.extract_strided_slice %156 {offsets = [0, 64], sizes = [4, 32], strides = [1, 1]} : vector<4x128xf32> to vector<4x32xf32>
    %160 = vector.extract_strided_slice %155 {offsets = [0, 96], sizes = [4, 32], strides = [1, 1]} : vector<4x128xf32> to vector<4x32xf32>
    %161 = arith.mulf %158, %147 : vector<4x32xf32>
    %162 = arith.mulf %157, %159 : vector<4x32xf32>
    %163 = arith.addf %161, %162 : vector<4x32xf32>
    %164 = math.tanh %163 : vector<4x32xf32>
    %165 = arith.mulf %160, %164 : vector<4x32xf32>
    %c5_i32 = arith.constant 5 : i32
    %166 = vector.broadcast %c5_i32 : i32 to vector<4x32xi32>
    %167 = arith.cmpi sgt, %10, %166 : vector<4x32xi32>
    %cst_49 = arith.constant 0.000000e+00 : f32
    %168 = vector.broadcast %cst_49 : f32 to vector<4x32xf32>
    %169 = arith.select %167, %165, %168 : vector<4x32xi1>, vector<4x32xf32>
    %c5 = arith.constant 5 : index
    %c0_50 = arith.constant 0 : index
    %c0_51 = arith.constant 0 : index
    %170 = vector.load %arg6[%c5, %c0_50, %c0_51] : memref<8x4x32xf32, #tpu.memory_space<vmem>>, vector<1x4x32xf32>
    %171 = vector.shape_cast %170 : vector<1x4x32xf32> to vector<4x32xf32>
    %172 = vector.shape_cast %169 : vector<4x32xf32> to vector<1x4x32xf32>
    tpu.vector_store %arg6[%c5, %c0_50, %c0_51], %172 {strides = array<i32>} : memref<8x4x32xf32, #tpu.memory_space<vmem>>, vector<1x4x32xf32>,
    %173 = arith.select %167, %165, %146 : vector<4x32xi1>, vector<4x32xf32>
    %174 = arith.select %167, %163, %147 : vector<4x32xi1>, vector<4x32xf32>
    %c24 = arith.constant 24 : index
    %c0_52 = arith.constant 0 : index
    %175 = vector.load %arg9[%c24, %c0_52] : memref<32x128xf32, #tpu.memory_space<vmem>>, vector<4x128xf32>
    %cst_53 = arith.constant dense<0.000000e+00> : vector<4x128xf32>
    %176 = tpu.matmul %173, %7, %cst_53 {dimension_numbers = #tpu.dot_dimension_numbers<[1], [0], [0], [1], [0, 0, 1, 1], [], []>} : vector<4x32xf32>, vector<32x128xf32>, vector<4x128xf32> -> vector<4x128xf32>
    %177 = arith.addf %175, %176 : vector<4x128xf32>
    %178 = arith.negf %177 : vector<4x128xf32>
    %179 = math.exp %178 : vector<4x128xf32>
    %cst_54 = arith.constant 1.000000e+00 : f32
    %180 = vector.broadcast %cst_54 : f32 to vector<4x128xf32>
    %181 = arith.addf %180, %179 : vector<4x128xf32>
    %182 = arith.divf %180, %181 : vector<4x128xf32>
    %183 = math.tanh %177 : vector<4x128xf32>
    %184 = vector.extract_strided_slice %182 {offsets = [0, 0], sizes = [4, 32], strides = [1, 1]} : vector<4x128xf32> to vector<4x32xf32>
    %185 = vector.extract_strided_slice %182 {offsets = [0, 32], sizes = [4, 32], strides = [1, 1]} : vector<4x128xf32> to vector<4x32xf32>
    %186 = vector.extract_strided_slice %183 {offsets = [0, 64], sizes = [4, 32], strides = [1, 1]} : vector<4x128xf32> to vector<4x32xf32>
    %187 = vector.extract_strided_slice %182 {offsets = [0, 96], sizes = [4, 32], strides = [1, 1]} : vector<4x128xf32> to vector<4x32xf32>
    %188 = arith.mulf %185, %174 : vector<4x32xf32>
    %189 = arith.mulf %184, %186 : vector<4x32xf32>
    %190 = arith.addf %188, %189 : vector<4x32xf32>
    %191 = math.tanh %190 : vector<4x32xf32>
    %192 = arith.mulf %187, %191 : vector<4x32xf32>
    %c6_i32 = arith.constant 6 : i32
    %193 = vector.broadcast %c6_i32 : i32 to vector<4x32xi32>
    %194 = arith.cmpi sgt, %10, %193 : vector<4x32xi32>
    %cst_55 = arith.constant 0.000000e+00 : f32
    %195 = vector.broadcast %cst_55 : f32 to vector<4x32xf32>
    %196 = arith.select %194, %192, %195 : vector<4x32xi1>, vector<4x32xf32>
    %c6 = arith.constant 6 : index
    %c0_56 = arith.constant 0 : index
    %c0_57 = arith.constant 0 : index
    %197 = vector.load %arg6[%c6, %c0_56, %c0_57] : memref<8x4x32xf32, #tpu.memory_space<vmem>>, vector<1x4x32xf32>
    %198 = vector.shape_cast %197 : vector<1x4x32xf32> to vector<4x32xf32>
    %199 = vector.shape_cast %196 : vector<4x32xf32> to vector<1x4x32xf32>
    tpu.vector_store %arg6[%c6, %c0_56, %c0_57], %199 {strides = array<i32>} : memref<8x4x32xf32, #tpu.memory_space<vmem>>, vector<1x4x32xf32>,
    %200 = arith.select %194, %192, %173 : vector<4x32xi1>, vector<4x32xf32>
    %201 = arith.select %194, %190, %174 : vector<4x32xi1>, vector<4x32xf32>
    %c28 = arith.constant 28 : index
    %c0_58 = arith.constant 0 : index
    %202 = vector.load %arg9[%c28, %c0_58] : memref<32x128xf32, #tpu.memory_space<vmem>>, vector<4x128xf32>
    %cst_59 = arith.constant dense<0.000000e+00> : vector<4x128xf32>
    %203 = tpu.matmul %200, %7, %cst_59 {dimension_numbers = #tpu.dot_dimension_numbers<[1], [0], [0], [1], [0, 0, 1, 1], [], []>} : vector<4x32xf32>, vector<32x128xf32>, vector<4x128xf32> -> vector<4x128xf32>
    %204 = arith.addf %202, %203 : vector<4x128xf32>
    %205 = arith.negf %204 : vector<4x128xf32>
    %206 = math.exp %205 : vector<4x128xf32>
    %cst_60 = arith.constant 1.000000e+00 : f32
    %207 = vector.broadcast %cst_60 : f32 to vector<4x128xf32>
    %208 = arith.addf %207, %206 : vector<4x128xf32>
    %209 = arith.divf %207, %208 : vector<4x128xf32>
    %210 = math.tanh %204 : vector<4x128xf32>
    %211 = vector.extract_strided_slice %209 {offsets = [0, 0], sizes = [4, 32], strides = [1, 1]} : vector<4x128xf32> to vector<4x32xf32>
    %212 = vector.extract_strided_slice %209 {offsets = [0, 32], sizes = [4, 32], strides = [1, 1]} : vector<4x128xf32> to vector<4x32xf32>
    %213 = vector.extract_strided_slice %210 {offsets = [0, 64], sizes = [4, 32], strides = [1, 1]} : vector<4x128xf32> to vector<4x32xf32>
    %214 = vector.extract_strided_slice %209 {offsets = [0, 96], sizes = [4, 32], strides = [1, 1]} : vector<4x128xf32> to vector<4x32xf32>
    %215 = arith.mulf %212, %201 : vector<4x32xf32>
    %216 = arith.mulf %211, %213 : vector<4x32xf32>
    %217 = arith.addf %215, %216 : vector<4x32xf32>
    %218 = math.tanh %217 : vector<4x32xf32>
    %219 = arith.mulf %214, %218 : vector<4x32xf32>
    %c7_i32 = arith.constant 7 : i32
    %220 = vector.broadcast %c7_i32 : i32 to vector<4x32xi32>
    %221 = arith.cmpi sgt, %10, %220 : vector<4x32xi32>
    %cst_61 = arith.constant 0.000000e+00 : f32
    %222 = vector.broadcast %cst_61 : f32 to vector<4x32xf32>
    %223 = arith.select %221, %219, %222 : vector<4x32xi1>, vector<4x32xf32>
    %c7 = arith.constant 7 : index
    %c0_62 = arith.constant 0 : index
    %c0_63 = arith.constant 0 : index
    %224 = vector.load %arg6[%c7, %c0_62, %c0_63] : memref<8x4x32xf32, #tpu.memory_space<vmem>>, vector<1x4x32xf32>
    %225 = vector.shape_cast %224 : vector<1x4x32xf32> to vector<4x32xf32>
    %226 = vector.shape_cast %223 : vector<4x32xf32> to vector<1x4x32xf32>
    tpu.vector_store %arg6[%c7, %c0_62, %c0_63], %226 {strides = array<i32>} : memref<8x4x32xf32, #tpu.memory_space<vmem>>, vector<1x4x32xf32>,
    %227 = arith.select %221, %219, %200 : vector<4x32xi1>, vector<4x32xf32>
    %228 = arith.select %221, %217, %201 : vector<4x32xi1>, vector<4x32xf32>
    %c0_64 = arith.constant 0 : index
    %c0_65 = arith.constant 0 : index
    %c0_66 = arith.constant 0 : index
    %229 = vector.load %arg7[%c0_64, %c0_65, %c0_66] : memref<1x4x32xf32, #tpu.memory_space<vmem>>, vector<1x4x32xf32>
    %230 = vector.shape_cast %229 : vector<1x4x32xf32> to vector<4x32xf32>
    %231 = vector.shape_cast %227 : vector<4x32xf32> to vector<1x4x32xf32>
    tpu.vector_store %arg7[%c0_64, %c0_65, %c0_66], %231 {strides = array<i32>} : memref<1x4x32xf32, #tpu.memory_space<vmem>>, vector<1x4x32xf32>,
    %c0_67 = arith.constant 0 : index
    %c0_68 = arith.constant 0 : index
    %c0_69 = arith.constant 0 : index
    %232 = vector.load %arg8[%c0_67, %c0_68, %c0_69] : memref<1x4x32xf32, #tpu.memory_space<vmem>>, vector<1x4x32xf32>
    %233 = vector.shape_cast %232 : vector<1x4x32xf32> to vector<4x32xf32>
    %234 = vector.shape_cast %228 : vector<4x32xf32> to vector<1x4x32xf32>
    tpu.vector_store %arg8[%c0_67, %c0_68, %c0_69], %234 {strides = array<i32>} : memref<1x4x32xf32, #tpu.memory_space<vmem>>, vector<1x4x32xf32>,
    return
  }
  func.func @transform_0(%arg0: i32) -> (i32, i32) {
    %c0_i32 = arith.constant 0 : i32
    %c0_i32_0 = arith.constant 0 : i32
    %c0_i32_1 = arith.constant 0 : i32
    return %c0_i32, %c0_i32_0 : i32, i32
  }
  func.func @transform_1(%arg0: i32) -> (i32, i32) {
    %c0_i32 = arith.constant 0 : i32
    %c0_i32_0 = arith.constant 0 : i32
    %c0_i32_1 = arith.constant 0 : i32
    return %c0_i32, %c0_i32_0 : i32, i32
  }
  func.func @transform_2(%arg0: i32) -> (i32, i32) {
    %c0_i32 = arith.constant 0 : i32
    %c0_i32_0 = arith.constant 0 : i32
    %c0_i32_1 = arith.constant 0 : i32
    return %c0_i32, %c0_i32_0 : i32, i32
  }
  func.func @transform_3(%arg0: i32) -> (i32, i32) {
    %c0_i32 = arith.constant 0 : i32
    %c0_i32_0 = arith.constant 0 : i32
    %c0_i32_1 = arith.constant 0 : i32
    return %c0_i32, %c0_i32_0 : i32, i32
  }
  func.func @transform_4(%arg0: i32) -> (i32, i32) {
    %c0_i32 = arith.constant 0 : i32
    %c0_i32_0 = arith.constant 0 : i32
    %c0_i32_1 = arith.constant 0 : i32
    return %c0_i32, %c0_i32_0 : i32, i32
  }
  func.func @transform_5(%arg0: i32) -> (i32, i32, i32) {
    %c0_i32 = arith.constant 0 : i32
    %c0_i32_0 = arith.constant 0 : i32
    %c0_i32_1 = arith.constant 0 : i32
    %c0_i32_2 = arith.constant 0 : i32
    return %c0_i32, %c0_i32_0, %c0_i32_1 : i32, i32, i32
  }
  func.func @transform_6(%arg0: i32) -> (i32, i32, i32) {
    %c0_i32 = arith.constant 0 : i32
    %c0_i32_0 = arith.constant 0 : i32
    %c0_i32_1 = arith.constant 0 : i32
    %c0_i32_2 = arith.constant 0 : i32
    return %c0_i32, %c0_i32_0, %c0_i32_1 : i32, i32, i32
  }
  func.func @transform_7(%arg0: i32) -> (i32, i32, i32) {
    %c0_i32 = arith.constant 0 : i32
    %c0_i32_0 = arith.constant 0 : i32
    %c0_i32_1 = arith.constant 0 : i32
    %c0_i32_2 = arith.constant 0 : i32
    return %c0_i32, %c0_i32_0, %c0_i32_1 : i32, i32, i32
  }
}

</mosaic_0001>

<llo_original>
// kernel: rnn_encoder_forward.1
$region0: #{rnn_encoder_forward.1}
  #allocation0 [shape = 'u32[]', space=smem, size = 0x4, offset = 0x4, fixed_abs, tag = 'smem constant byte address 0x4 - core index']
  #allocation1 [shape = 'u32[144,128]{1,0:T(1,128)}', space=vmem, size = 0x12000, scoped, tag = 'internal scratch']
  #allocation2 [shape = 'f32[32,128]{1,0:T(8,128)}', space=vmem, size = 0x4000, scoped, tag = 'scratch operand']
  %s0 = inlined_call_operand.vmem [shape: s32[4,1], index: 0, kind: input, shape index: {}]
  %s1 = inlined_call_operand.vmem [shape: f32[32,16], index: 1, kind: input, shape index: {}]
  %s2 = inlined_call_operand.vmem [shape: f32[16,128], index: 2, kind: input, shape index: {}]
  %s3 = inlined_call_operand.vmem [shape: f32[32,128], index: 3, kind: input, shape index: {}]
  %s4 = inlined_call_operand.vmem [shape: f32[1,128], index: 4, kind: input, shape index: {}]
  %s5 = inlined_call_operand.hbm [shape: f32[8,4,32], index: 5, kind: output, shape index: {0}]
  %s6 = inlined_call_operand.hbm [shape: f32[1,4,32], index: 6, kind: output, shape index: {1}]
  %s7 = inlined_call_operand.hbm [shape: f32[1,4,32], index: 7, kind: output, shape index: {2}]
  %8 = xla_tuple %s5, %s6, %s7
  %s9 = sld [smem:[#allocation0]]
  $region46: #{rnn_encoder_forward.1} parent=0
    _
  %s11 = ssub.s32 1, %s9
  %s12 = scalar_select 0, %s11, %s9
  $region1: #{rnn_encoder_forward.1} parent=0
    #allocation3 [shape = 'u8[16384]{0}', space=vmem, size = 0x4000, scoped, tag = 'output window, operand 0, single buffered']
    #allocation4 [shape = 's32[1]{0}', space=sflag, size = 0x4, scoped, tag = 'scoped memory for rnn_encoder_forward.1']
    #allocation5 [shape = 'u8[2048]{0}', space=vmem, size = 0x800, scoped, tag = 'output window, operand 1, single buffered']
    #allocation6 [shape = 's32[1]{0}', space=sflag, size = 0x4, scoped, tag = 'scoped memory for rnn_encoder_forward.1']
    #allocation7 [shape = 'u8[2048]{0}', space=vmem, size = 0x800, scoped, tag = 'output window, operand 2, single buffered']
    %13 = vsyncpa [#allocation4], 0
    %14 = vsyncpa [#allocation6], 0
    // Predicated region
    $region2: #{rnn_encoder_forward.1} parent=1 // pred_check
      _
    $region3: #{rnn_encoder_forward.1} parent=1 // pred_check_branch
      %16 = sbr.rel (0) target = $region5
    $region4: #{rnn_encoder_forward.1} parent=1 // pred_region
      _
    $region5: #{rnn_encoder_forward.1} parent=1 // pred_fallthru
      _
    // Predicated region
    $region6: #{rnn_encoder_forward.1} parent=1 // pred_check
      _
    $region7: #{rnn_encoder_forward.1} parent=1 // pred_check_branch
      %18 = sbr.rel (0) target = $region9
    $region8: #{rnn_encoder_forward.1} parent=1 // pred_region
      _
    $region9: #{rnn_encoder_forward.1} parent=1 // pred_fallthru
      _
    // Predicated region
    $region10: #{rnn_encoder_forward.1} parent=1 // pred_check
      _
    $region11: #{rnn_encoder_forward.1} parent=1 // pred_check_branch
      %20 = sbr.rel (0) target = $region13
    $region12: #{rnn_encoder_forward.1} parent=1 // pred_region
      _
    $region13: #{rnn_encoder_forward.1} parent=1 // pred_fallthru
      _
    // Predicated region
    $region14: #{rnn_encoder_forward.1} parent=1 // pred_check
      _
    $region15: #{rnn_encoder_forward.1} parent=1 // pred_check_branch
      %22 = sbr.rel (0) target = $region17
    $region16: #{rnn_encoder_forward.1} parent=1 // pred_region
      _
    $region17: #{rnn_encoder_forward.1} parent=1 // pred_fallthru
      _
    // Predicated region
    $region18: #{rnn_encoder_forward.1} parent=1 // pred_check
      _
    $region19: #{rnn_encoder_forward.1} parent=1 // pred_check_branch
      %24 = sbr.rel (0) target = $region21
    $region20: #{rnn_encoder_forward.1} parent=1 // pred_region
      _
    $region21: #{rnn_encoder_forward.1} parent=1 // pred_fallthru
      _
    %v25 = vld [vmem:[%s1] sm:$0xff]
    %v26 = vld [vmem:[%s1 + $0x8] sm:$0xff]
    %v27 = vld [vmem:[%s1 + $0x10] sm:$0xff]
    %v28 = vld [vmem:[%s1 + $0x18] sm:$0xff]
    %v29 = vld [vmem:[%s2] sm:$0xff]
    %v30 = vld [vmem:[%s2 + $0x8] sm:$0xff]
    %v31 = vld [vmem:[%s4] sm:$0x1]
    %v33 = vlaneseq
    %v34 = vshrl.u32 %v33, 7
    %v35 = vsub.s32 0, %v34
    %v36 = vrot.slane %v31, %v35
    %vm38 = vcmask 130048
    %v40 = vsel %vm38, %v25, 0
    %v43 = vsel %vm38, %v26, 0
    %v46 = vsel %vm38, %v27, 0
    %v49 = vsel %vm38, %v28, 0
    %51 = vmatprep.subr.mxu0 0.0
    %52 = vmatpush1.msra.mxu0 %v29
    %53 = vmatprep.subr.mxu0 0.0
    %54 = vmatpush1.msra.mxu0 %v30
    %55 = vmatprep.subr.mxu0 0.0
    %56 = vmatpush1.msra.mxu0 0.0
    %57 = vmatprep.subr.mxu0 0.0
    %58 = vmatpush1.msra.mxu0 0.0
    %59 = vmatprep.subr.mxu0 0.0
    %60 = vmatpush1.msra.mxu0 0.0
    %61 = vmatprep.subr.mxu0 0.0
    %62 = vmatpush1.msra.mxu0 0.0
    %63 = vmatprep.subr.mxu0 0.0
    %64 = vmatpush1.msra.mxu0 0.0
    %65 = vmatprep.subr.mxu0 0.0
    %66 = vmatpush1.msra.mxu0 0.0
    %67 = vmatprep.subr.mxu0 0.0
    %68 = vmatpush1.msra.mxu0 0.0
    %69 = vmatprep.subr.mxu0 0.0
    %70 = vmatpush1.msra.mxu0 0.0
    %71 = vmatprep.subr.mxu0 0.0
    %72 = vmatpush1.msra.mxu0 0.0
    %73 = vmatprep.subr.mxu0 0.0
    %74 = vmatpush1.msra.mxu0 0.0
    %75 = vmatprep.subr.mxu0 0.0
    %76 = vmatpush1.msra.mxu0 0.0
    %77 = vmatprep.subr.mxu0 0.0
    %78 = vmatpush1.msra.mxu0 0.0
    %79 = vmatprep.subr.mxu0 0.0
    %80 = vmatpush1.msra.mxu0 0.0
    %81 = vmatprep.subr.mxu0 0.0
    %82 = vmatpush1.msra.mxu0 0.0
    %83 = vmatprep.subr.mxu0 0.0
    %84 = vmatpush1.msra.mxu0 0.0
    %85 = vmatprep.subr.mxu0 0.0
    %86 = vmatpush1.msra.mxu0 0.0
    %87 = vmatprep.subr.mxu0 0.0
    %88 = vmatpush1.msra.mxu0 0.0
    %89 = vmatprep.subr.mxu0 0.0
    %90 = vmatpush1.msra.mxu0 0.0
    %91 = vmatprep.subr.mxu0 0.0
    %92 = vmatpush1.msra.mxu0 0.0
    %93 = vmatprep.subr.mxu0 0.0
    %94 = vmatpush1.msra.mxu0 0.0
    %95 = vmatprep.subr.mxu0 0.0
    %96 = vmatpush1.msra.mxu0 0.0
    %97 = vmatprep.subr.mxu0 0.0
    %98 = vmatpush1.msra.mxu0 0.0
    %99 = vmatprep.subr.mxu0 0.0
    %100 = vmatpush1.msra.mxu0 0.0
    %101 = vmatprep.subr.mxu0 0.0
    %102 = vmatpush1.msra.mxu0 0.0
    %103 = vmatprep.subr.mxu0 0.0
    %104 = vmatpush1.msra.mxu0 0.0
    %105 = vmatprep.subr.mxu0 0.0
    %106 = vmatpush1.msra.mxu0 0.0
    %107 = vmatprep.subr.mxu0 0.0
    %108 = vmatpush1.msra.mxu0 0.0
    %109 = vmatprep.subr.mxu0 0.0
    %110 = vmatpush1.msra.mxu0 0.0
    %111 = vmatprep.subr.mxu0 0.0
    %112 = vmatpush1.msra.mxu0 0.0
    %113 = vmatprep.subr.mxu0 0.0
    %114 = vmatpush1.msra.mxu0 0.0
    %115 = vmatprep.mubr.f32.mxu0 0.0
    %116 = vmatmul.mubr.f32.gmra.mrb[0].mxu0 %v40
    %v117 = vpop.f32.mrb[0].mxu0
    %v118 = vadd.f32 %v36, %v117
    %v119 = vpop.f32.mrb[0].mxu0
    %120 = vmatprep.mubr.f32.mxu0 0.0
    %121 = vmatmul.mubr.f32.gmra.mrb[0].mxu0 %v43
    %v122 = vpop.f32.mrb[0].mxu0
    %v123 = vadd.f32 %v36, %v122
    %v124 = vpop.f32.mrb[0].mxu0
    %125 = vmatprep.mubr.f32.mxu0 0.0
    %126 = vmatmul.mubr.f32.gmra.mrb[0].mxu0 %v46
    %v127 = vpop.f32.mrb[0].mxu0
    %v128 = vadd.f32 %v36, %v127
    %v129 = vpop.f32.mrb[0].mxu0
    %130 = vmatprep.mubr.f32.mxu0 0.0
    %131 = vmatmul.mubr.f32.gmra.mrb[0].mxu0 %v49
    %v132 = vpop.f32.mrb[0].mxu0
    %v133 = vadd.f32 %v36, %v132
    %v134 = vpop.f32.mrb[0].mxu0
    %135 = vdwg.mxu0
    %136 = vst [vmem:[#allocation2] sm:$0xff] %v118
    %137 = vst [vmem:[#allocation2 + $0x8] sm:$0xff] %v123
    %138 = vst [vmem:[#allocation2 + $0x10] sm:$0xff] %v128
    %139 = vst [vmem:[#allocation2 + $0x18] sm:$0xff] %v133
    %v140 = vld [vmem:[%s3] sm:$0xff]
    %v141 = vld [vmem:[%s3 + $0x8] sm:$0xff]
    %v142 = vld [vmem:[%s3 + $0x10] sm:$0xff]
    %v143 = vld [vmem:[%s3 + $0x18] sm:$0xff]
    %v144 = vld [vmem:[%s0] sm:$0xf]
    %145 = vset.pattern.permute.xlu0 0
    %146 = vperm.xlu0 %145, %v144
    %v147 = vpop.permute.xlu0 %146
    %v148 = vld [vmem:[#allocation2] sm:$0xf]
    %vm149 = vcmask 261120
    %v151 = vsel %vm149, 0.0, 0
    %153 = vmatprep.subr.mxu0 0.0
    %154 = vmatpush1.msra.mxu0 %v140
    %155 = vmatprep.subr.mxu0 0.0
    %156 = vmatpush1.msra.mxu0 %v141
    %157 = vmatprep.subr.mxu0 0.0
    %158 = vmatpush1.msra.mxu0 %v142
    %159 = vmatprep.subr.mxu0 0.0
    %160 = vmatpush1.msra.mxu0 %v143
    %161 = vmatprep.subr.mxu0 0.0
    %162 = vmatpush1.msra.mxu0 0.0
    %163 = vmatprep.subr.mxu0 0.0
    %164 = vmatpush1.msra.mxu0 0.0
    %165 = vmatprep.subr.mxu0 0.0
    %166 = vmatpush1.msra.mxu0 0.0
    %167 = vmatprep.subr.mxu0 0.0
    %168 = vmatpush1.msra.mxu0 0.0
    %169 = vmatprep.subr.mxu0 0.0
    %170 = vmatpush1.msra.mxu0 0.0
    %171 = vmatprep.subr.mxu0 0.0
    %172 = vmatpush1.msra.mxu0 0.0
    %173 = vmatprep.subr.mxu0 0.0
    %174 = vmatpush1.msra.mxu0 0.0
    %175 = vmatprep.subr.mxu0 0.0
    %176 = vmatpush1.msra.mxu0 0.0
    %177 = vmatprep.subr.mxu0 0.0
    %178 = vmatpush1.msra.mxu0 0.0
    %179 = vmatprep.subr.mxu0 0.0
    %180 = vmatpush1.msra.mxu0 0.0
    %181 = vmatprep.subr.mxu0 0.0
    %182 = vmatpush1.msra.mxu0 0.0
    %183 = vmatprep.subr.mxu0 0.0
    %184 = vmatpush1.msra.mxu0 0.0
    %185 = vmatprep.subr.mxu0 0.0
    %186 = vmatpush1.msra.mxu0 0.0
    %187 = vmatprep.subr.mxu0 0.0
    %188 = vmatpush1.msra.mxu0 0.0
    %189 = vmatprep.subr.mxu0 0.0
    %190 = vmatpush1.msra.mxu0 0.0
    %191 = vmatprep.subr.mxu0 0.0
    %192 = vmatpush1.msra.mxu0 0.0
    %193 = vmatprep.subr.mxu0 0.0
    %194 = vmatpush1.msra.mxu0 0.0
    %195 = vmatprep.subr.mxu0 0.0
    %196 = vmatpush1.msra.mxu0 0.0
    %197 = vmatprep.subr.mxu0 0.0
    %198 = vmatpush1.msra.mxu0 0.0
    %199 = vmatprep.subr.mxu0 0.0
    %200 = vmatpush1.msra.mxu0 0.0
    %201 = vmatprep.subr.mxu0 0.0
    %202 = vmatpush1.msra.mxu0 0.0
    %203 = vmatprep.subr.mxu0 0.0
    %204 = vmatpush1.msra.mxu0 0.0
    %205 = vmatprep.subr.mxu0 0.0
    %206 = vmatpush1.msra.mxu0 0.0
    %207 = vmatprep.subr.mxu0 0.0
    %208 = vmatpush1.msra.mxu0 0.0
    %209 = vmatprep.subr.mxu0 0.0
    %210 = vmatpush1.msra.mxu0 0.0
    %211 = vmatprep.subr.mxu0 0.0
    %212 = vmatpush1.msra.mxu0 0.0
    %213 = vmatprep.subr.mxu0 0.0
    %214 = vmatpush1.msra.mxu0 0.0
    %215 = vmatprep.subr.mxu0 0.0
    %216 = vmatpush1.msra.mxu0 0.0
    %217 = vmatprep.mubr.f32.mxu0 0.0
    %218 = vmatmul.mubr.f32.gmra.mrb[0].mxu0 %v151
    %v219 = vpop.f32.mrb[0].mxu0
    %v220 = vadd.f32 0.0, %v219
    %v221 = vpop.f32.mrb[0].mxu0
    %222 = vdwg.mxu0
    %v223 = vadd.f32 %v148, %v220
    %v224 = vxor.u32 %v223, 2147483648
    %v225 = vmul.f32 %v224, 1.442695
    %v226 = vpow.pop %v225
    %v227 = vadd.f32 %v226, 1.0
    %v228 = vrcp.pop %v227
    %v229 = vmul.f32 1.0, %v228
    %v230 = vtanh.pop %v223
    %v231 = vmul.f32 %v229, 0.0
    %233 = vrot.lane.b32.xlu0 %v230, 64
    %v234 = vpop.permute.xlu0 %233
    %v236 = vmul.f32 %v229, %v234
    %238 = vrot.lane.b32.xlu0 %v236, 32
    %v239 = vpop.permute.xlu0 %238
    %v241 = vadd.f32 %v231, %v239
    %v242 = vtanh.pop %v241
    %244 = vrot.lane.b32.xlu0 %v242, 64
    %v245 = vpop.permute.xlu0 %244
    %v247 = vmul.f32 %v229, %v245
    %vm248 = vcmp.gt.s32.totalorder %v147, 0
    %v249 = vsel %vm248, %v247, 0.0
    %251 = vrot.lane.b32.xlu0 %v249, 32
    %v252 = vpop.permute.xlu0 %251
    %vm254 = vcmask 257024
    %255 = vst.msk [vmem:[#allocation3] sm:$0xf] %vm254, %v252
    %v256 = vsel %vm248, %v241, 0.0
    %v257 = vld [vmem:[#allocation2 + $0x4] sm:$0xf]
    %v258 = vsel %vm149, %v252, 0
    %260 = vmatprep.subr.mxu0 0.0
    %261 = vmatpush1.msra.mxu0 %v140
    %262 = vmatprep.subr.mxu0 0.0
    %263 = vmatpush1.msra.mxu0 %v141
    %264 = vmatprep.subr.mxu0 0.0
    %265 = vmatpush1.msra.mxu0 %v142
    %266 = vmatprep.subr.mxu0 0.0
    %267 = vmatpush1.msra.mxu0 %v143
    %268 = vmatprep.subr.mxu0 0.0
    %269 = vmatpush1.msra.mxu0 0.0
    %270 = vmatprep.subr.mxu0 0.0
    %271 = vmatpush1.msra.mxu0 0.0
    %272 = vmatprep.subr.mxu0 0.0
    %273 = vmatpush1.msra.mxu0 0.0
    %274 = vmatprep.subr.mxu0 0.0
    %275 = vmatpush1.msra.mxu0 0.0
    %276 = vmatprep.subr.mxu0 0.0
    %277 = vmatpush1.msra.mxu0 0.0
    %278 = vmatprep.subr.mxu0 0.0
    %279 = vmatpush1.msra.mxu0 0.0
    %280 = vmatprep.subr.mxu0 0.0
    %281 = vmatpush1.msra.mxu0 0.0
    %282 = vmatprep.subr.mxu0 0.0
    %283 = vmatpush1.msra.mxu0 0.0
    %284 = vmatprep.subr.mxu0 0.0
    %285 = vmatpush1.msra.mxu0 0.0
    %286 = vmatprep.subr.mxu0 0.0
    %287 = vmatpush1.msra.mxu0 0.0
    %288 = vmatprep.subr.mxu0 0.0
    %289 = vmatpush1.msra.mxu0 0.0
    %290 = vmatprep.subr.mxu0 0.0
    %291 = vmatpush1.msra.mxu0 0.0
    %292 = vmatprep.subr.mxu0 0.0
    %293 = vmatpush1.msra.mxu0 0.0
    %294 = vmatprep.subr.mxu0 0.0
    %295 = vmatpush1.msra.mxu0 0.0
    %296 = vmatprep.subr.mxu0 0.0
    %297 = vmatpush1.msra.mxu0 0.0
    %298 = vmatprep.subr.mxu0 0.0
    %299 = vmatpush1.msra.mxu0 0.0
    %300 = vmatprep.subr.mxu0 0.0
    %301 = vmatpush1.msra.mxu0 0.0
    %302 = vmatprep.subr.mxu0 0.0
    %303 = vmatpush1.msra.mxu0 0.0
    %304 = vmatprep.subr.mxu0 0.0
    %305 = vmatpush1.msra.mxu0 0.0
    %306 = vmatprep.subr.mxu0 0.0
    %307 = vmatpush1.msra.mxu0 0.0
    %308 = vmatprep.subr.mxu0 0.0
    %309 = vmatpush1.msra.mxu0 0.0
    %310 = vmatprep.subr.mxu0 0.0
    %311 = vmatpush1.msra.mxu0 0.0
    %312 = vmatprep.subr.mxu0 0.0
    %313 = vmatpush1.msra.mxu0 0.0
    %314 = vmatprep.subr.mxu0 0.0
    %315 = vmatpush1.msra.mxu0 0.0
    %316 = vmatprep.subr.mxu0 0.0
    %317 = vmatpush1.msra.mxu0 0.0
    %318 = vmatprep.subr.mxu0 0.0
    %319 = vmatpush1.msra.mxu0 0.0
    %320 = vmatprep.subr.mxu0 0.0
    %321 = vmatpush1.msra.mxu0 0.0
    %322 = vmatprep.subr.mxu0 0.0
    %323 = vmatpush1.msra.mxu0 0.0
    %324 = vmatprep.mubr.f32.mxu0 0.0
    %325 = vmatmul.mubr.f32.gmra.mrb[0].mxu0 %v258
    %v326 = vpop.f32.mrb[0].mxu0
    %v327 = vadd.f32 0.0, %v326
    %v328 = vpop.f32.mrb[0].mxu0
    %329 = vdwg.mxu0
    %v330 = vadd.f32 %v257, %v327
    %v331 = vxor.u32 %v330, 2147483648
    %v332 = vmul.f32 %v331, 1.442695
    %v333 = vpow.pop %v332
    %v334 = vadd.f32 %v333, 1.0
    %v335 = vrcp.pop %v334
    %v336 = vmul.f32 1.0, %v335
    %v337 = vtanh.pop %v330
    %v338 = vmul.f32 %v336, %v256
    %340 = vrot.lane.b32.xlu0 %v337, 64
    %v341 = vpop.permute.xlu0 %340
    %v343 = vmul.f32 %v336, %v341
    %345 = vrot.lane.b32.xlu0 %v343, 32
    %v346 = vpop.permute.xlu0 %345
    %v348 = vadd.f32 %v338, %v346
    %v349 = vtanh.pop %v348
    %351 = vrot.lane.b32.xlu0 %v349, 64
    %v352 = vpop.permute.xlu0 %351
    %v354 = vmul.f32 %v336, %v352
    %vm355 = vcmp.gt.s32.totalorder %v147, 1
    %v356 = vsel %vm355, %v354, 0.0
    %358 = vrot.lane.b32.xlu0 %v356, 32
    %v359 = vpop.permute.xlu0 %358
    %s361 = scalar_lea.vmem [#allocation3], 4
    %362 = vst.msk [vmem:[%s361] sm:$0xf] %vm254, %v359
    %v363 = vsel %vm355, %v354, %v249
    %v364 = vsel %vm355, %v348, %v256
    %v365 = vld [vmem:[#allocation2 + $0x8] sm:$0xf]
    %367 = vrot.lane.b32.xlu0 %v363, 32
    %v368 = vpop.permute.xlu0 %367
    %v369 = vsel %vm149, %v368, 0
    %371 = vmatprep.subr.mxu0 0.0
    %372 = vmatpush1.msra.mxu0 %v140
    %373 = vmatprep.subr.mxu0 0.0
    %374 = vmatpush1.msra.mxu0 %v141
    %375 = vmatprep.subr.mxu0 0.0
    %376 = vmatpush1.msra.mxu0 %v142
    %377 = vmatprep.subr.mxu0 0.0
    %378 = vmatpush1.msra.mxu0 %v143
    %379 = vmatprep.subr.mxu0 0.0
    %380 = vmatpush1.msra.mxu0 0.0
    %381 = vmatprep.subr.mxu0 0.0
    %382 = vmatpush1.msra.mxu0 0.0
    %383 = vmatprep.subr.mxu0 0.0
    %384 = vmatpush1.msra.mxu0 0.0
    %385 = vmatprep.subr.mxu0 0.0
    %386 = vmatpush1.msra.mxu0 0.0
    %387 = vmatprep.subr.mxu0 0.0
    %388 = vmatpush1.msra.mxu0 0.0
    %389 = vmatprep.subr.mxu0 0.0
    %390 = vmatpush1.msra.mxu0 0.0
    %391 = vmatprep.subr.mxu0 0.0
    %392 = vmatpush1.msra.mxu0 0.0
    %393 = vmatprep.subr.mxu0 0.0
    %394 = vmatpush1.msra.mxu0 0.0
    %395 = vmatprep.subr.mxu0 0.0
    %396 = vmatpush1.msra.mxu0 0.0
    %397 = vmatprep.subr.mxu0 0.0
    %398 = vmatpush1.msra.mxu0 0.0
    %399 = vmatprep.subr.mxu0 0.0
    %400 = vmatpush1.msra.mxu0 0.0
    %401 = vmatprep.subr.mxu0 0.0
    %402 = vmatpush1.msra.mxu0 0.0
    %403 = vmatprep.subr.mxu0 0.0
    %404 = vmatpush1.msra.mxu0 0.0
    %405 = vmatprep.subr.mxu0 0.0
    %406 = vmatpush1.msra.mxu0 0.0
    %407 = vmatprep.subr.mxu0 0.0
    %408 = vmatpush1.msra.mxu0 0.0
    %409 = vmatprep.subr.mxu0 0.0
    %410 = vmatpush1.msra.mxu0 0.0
    %411 = vmatprep.subr.mxu0 0.0
    %412 = vmatpush1.msra.mxu0 0.0
    %413 = vmatprep.subr.mxu0 0.0
    %414 = vmatpush1.msra.mxu0 0.0
    %415 = vmatprep.subr.mxu0 0.0
    %416 = vmatpush1.msra.mxu0 0.0
    %417 = vmatprep.subr.mxu0 0.0
    %418 = vmatpush1.msra.mxu0 0.0
    %419 = vmatprep.subr.mxu0 0.0
    %420 = vmatpush1.msra.mxu0 0.0
    %421 = vmatprep.subr.mxu0 0.0
    %422 = vmatpush1.msra.mxu0 0.0
    %423 = vmatprep.subr.mxu0 0.0
    %424 = vmatpush1.msra.mxu0 0.0
    %425 = vmatprep.subr.mxu0 0.0
    %426 = vmatpush1.msra.mxu0 0.0
    %427 = vmatprep.subr.mxu0 0.0
    %428 = vmatpush1.msra.mxu0 0.0
    %429 = vmatprep.subr.mxu0 0.0
    %430 = vmatpush1.msra.mxu0 0.0
    %431 = vmatprep.subr.mxu0 0.0
    %432 = vmatpush1.msra.mxu0 0.0
    %433 = vmatprep.subr.mxu0 0.0
    %434 = vmatpush1.msra.mxu0 0.0
    %435 = vmatprep.mubr.f32.mxu0 0.0
    %436 = vmatmul.mubr.f32.gmra.mrb[0].mxu0 %v369
    %v437 = vpop.f32.mrb[0].mxu0
    %v438 = vadd.f32 0.0, %v437
    %v439 = vpop.f32.mrb[0].mxu0
    %440 = vdwg.mxu0
    %v441 = vadd.f32 %v365, %v438
    %v442 = vxor.u32 %v441, 2147483648
    %v443 = vmul.f32 %v442, 1.442695
    %v444 = vpow.pop %v443
    %v445 = vadd.f32 %v444, 1.0
    %v446 = vrcp.pop %v445
    %v447 = vmul.f32 1.0, %v446
    %v448 = vtanh.pop %v441
    %v449 = vmul.f32 %v447, %v364
    %451 = vrot.lane.b32.xlu0 %v448, 64
    %v452 = vpop.permute.xlu0 %451
    %v454 = vmul.f32 %v447, %v452
    %456 = vrot.lane.b32.xlu0 %v454, 32
    %v457 = vpop.permute.xlu0 %456
    %v459 = vadd.f32 %v449, %v457
    %v460 = vtanh.pop %v459
    %462 = vrot.lane.b32.xlu0 %v460, 64
    %v463 = vpop.permute.xlu0 %462
    %v465 = vmul.f32 %v447, %v463
    %vm466 = vcmp.gt.s32.totalorder %v147, 2
    %v467 = vsel %vm466, %v465, 0.0
    %469 = vrot.lane.b32.xlu0 %v467, 32
    %v470 = vpop.permute.xlu0 %469
    %s472 = scalar_lea.vmem [#allocation3], 8
    %473 = vst.msk [vmem:[%s472] sm:$0xf] %vm254, %v470
    %v474 = vsel %vm466, %v465, %v363
    %v475 = vsel %vm466, %v459, %v364
    %v476 = vld [vmem:[#allocation2 + $0xc] sm:$0xf]
    %478 = vrot.lane.b32.xlu0 %v474, 32
    %v479 = vpop.permute.xlu0 %478
    %v480 = vsel %vm149, %v479, 0
    %482 = vmatprep.subr.mxu0 0.0
    %483 = vmatpush1.msra.mxu0 %v140
    %484 = vmatprep.subr.mxu0 0.0
    %485 = vmatpush1.msra.mxu0 %v141
    %486 = vmatprep.subr.mxu0 0.0
    %487 = vmatpush1.msra.mxu0 %v142
    %488 = vmatprep.subr.mxu0 0.0
    %489 = vmatpush1.msra.mxu0 %v143
    %490 = vmatprep.subr.mxu0 0.0
    %491 = vmatpush1.msra.mxu0 0.0
    %492 = vmatprep.subr.mxu0 0.0
    %493 = vmatpush1.msra.mxu0 0.0
    %494 = vmatprep.subr.mxu0 0.0
    %495 = vmatpush1.msra.mxu0 0.0
    %496 = vmatprep.subr.mxu0 0.0
    %497 = vmatpush1.msra.mxu0 0.0
    %498 = vmatprep.subr.mxu0 0.0
    %499 = vmatpush1.msra.mxu0 0.0
    %500 = vmatprep.subr.mxu0 0.0
    %501 = vmatpush1.msra.mxu0 0.0
    %502 = vmatprep.subr.mxu0 0.0
    %503 = vmatpush1.msra.mxu0 0.0
    %504 = vmatprep.subr.mxu0 0.0
    %505 = vmatpush1.msra.mxu0 0.0
    %506 = vmatprep.subr.mxu0 0.0
    %507 = vmatpush1.msra.mxu0 0.0
    %508 = vmatprep.subr.mxu0 0.0
    %509 = vmatpush1.msra.mxu0 0.0
    %510 = vmatprep.subr.mxu0 0.0
    %511 = vmatpush1.msra.mxu0 0.0
    %512 = vmatprep.subr.mxu0 0.0
    %513 = vmatpush1.msra.mxu0 0.0
    %514 = vmatprep.subr.mxu0 0.0
    %515 = vmatpush1.msra.mxu0 0.0
    %516 = vmatprep.subr.mxu0 0.0
    %517 = vmatpush1.msra.mxu0 0.0
    %518 = vmatprep.subr.mxu0 0.0
    %519 = vmatpush1.msra.mxu0 0.0
    %520 = vmatprep.subr.mxu0 0.0
    %521 = vmatpush1.msra.mxu0 0.0
    %522 = vmatprep.subr.mxu0 0.0
    %523 = vmatpush1.msra.mxu0 0.0
    %524 = vmatprep.subr.mxu0 0.0
    %525 = vmatpush1.msra.mxu0 0.0
    %526 = vmatprep.subr.mxu0 0.0
    %527 = vmatpush1.msra.mxu0 0.0
    %528 = vmatprep.subr.mxu0 0.0
    %529 = vmatpush1.msra.mxu0 0.0
    %530 = vmatprep.subr.mxu0 0.0
    %531 = vmatpush1.msra.mxu0 0.0
    %532 = vmatprep.subr.mxu0 0.0
    %533 = vmatpush1.msra.mxu0 0.0
    %534 = vmatprep.subr.mxu0 0.0
    %535 = vmatpush1.msra.mxu0 0.0
    %536 = vmatprep.subr.mxu0 0.0
    %537 = vmatpush1.msra.mxu0 0.0
    %538 = vmatprep.subr.mxu0 0.0
    %539 = vmatpush1.msra.mxu0 0.0
    %540 = vmatprep.subr.mxu0 0.0
    %541 = vmatpush1.msra.mxu0 0.0
    %542 = vmatprep.subr.mxu0 0.0
    %543 = vmatpush1.msra.mxu0 0.0
    %544 = vmatprep.subr.mxu0 0.0
    %545 = vmatpush1.msra.mxu0 0.0
    %546 = vmatprep.mubr.f32.mxu0 0.0
    %547 = vmatmul.mubr.f32.gmra.mrb[0].mxu0 %v480
    %v548 = vpop.f32.mrb[0].mxu0
    %v549 = vadd.f32 0.0, %v548
    %v550 = vpop.f32.mrb[0].mxu0
    %551 = vdwg.mxu0
    %v552 = vadd.f32 %v476, %v549
    %v553 = vxor.u32 %v552, 2147483648
    %v554 = vmul.f32 %v553, 1.442695
    %v555 = vpow.pop %v554
    %v556 = vadd.f32 %v555, 1.0
    %v557 = vrcp.pop %v556
    %v558 = vmul.f32 1.0, %v557
    %v559 = vtanh.pop %v552
    %v560 = vmul.f32 %v558, %v475
    %562 = vrot.lane.b32.xlu0 %v559, 64
    %v563 = vpop.permute.xlu0 %562
    %v565 = vmul.f32 %v558, %v563
    %567 = vrot.lane.b32.xlu0 %v565, 32
    %v568 = vpop.permute.xlu0 %567
    %v570 = vadd.f32 %v560, %v568
    %v571 = vtanh.pop %v570
    %573 = vrot.lane.b32.xlu0 %v571, 64
    %v574 = vpop.permute.xlu0 %573
    %v576 = vmul.f32 %v558, %v574
    %vm577 = vcmp.gt.s32.totalorder %v147, 3
    %v578 = vsel %vm577, %v576, 0.0
    %580 = vrot.lane.b32.xlu0 %v578, 32
    %v581 = vpop.permute.xlu0 %580
    %s583 = scalar_lea.vmem [#allocation3], 12
    %584 = vst.msk [vmem:[%s583] sm:$0xf] %vm254, %v581
    %v585 = vsel %vm577, %v576, %v474
    %v586 = vsel %vm577, %v570, %v475
    %v587 = vld [vmem:[#allocation2 + $0x10] sm:$0xf]
    %589 = vrot.lane.b32.xlu0 %v585, 32
    %v590 = vpop.permute.xlu0 %589
    %v591 = vsel %vm149, %v590, 0
    %593 = vmatprep.subr.mxu0 0.0
    %594 = vmatpush1.msra.mxu0 %v140
    %595 = vmatprep.subr.mxu0 0.0
    %596 = vmatpush1.msra.mxu0 %v141
    %597 = vmatprep.subr.mxu0 0.0
    %598 = vmatpush1.msra.mxu0 %v142
    %599 = vmatprep.subr.mxu0 0.0
    %600 = vmatpush1.msra.mxu0 %v143
    %601 = vmatprep.subr.mxu0 0.0
    %602 = vmatpush1.msra.mxu0 0.0
    %603 = vmatprep.subr.mxu0 0.0
    %604 = vmatpush1.msra.mxu0 0.0
    %605 = vmatprep.subr.mxu0 0.0
    %606 = vmatpush1.msra.mxu0 0.0
    %607 = vmatprep.subr.mxu0 0.0
    %608 = vmatpush1.msra.mxu0 0.0
    %609 = vmatprep.subr.mxu0 0.0
    %610 = vmatpush1.msra.mxu0 0.0
    %611 = vmatprep.subr.mxu0 0.0
    %612 = vmatpush1.msra.mxu0 0.0
    %613 = vmatprep.subr.mxu0 0.0
    %614 = vmatpush1.msra.mxu0 0.0
    %615 = vmatprep.subr.mxu0 0.0
    %616 = vmatpush1.msra.mxu0 0.0
    %617 = vmatprep.subr.mxu0 0.0
    %618 = vmatpush1.msra.mxu0 0.0
    %619 = vmatprep.subr.mxu0 0.0
    %620 = vmatpush1.msra.mxu0 0.0
    %621 = vmatprep.subr.mxu0 0.0
    %622 = vmatpush1.msra.mxu0 0.0
    %623 = vmatprep.subr.mxu0 0.0
    %624 = vmatpush1.msra.mxu0 0.0
    %625 = vmatprep.subr.mxu0 0.0
    %626 = vmatpush1.msra.mxu0 0.0
    %627 = vmatprep.subr.mxu0 0.0
    %628 = vmatpush1.msra.mxu0 0.0
    %629 = vmatprep.subr.mxu0 0.0
    %630 = vmatpush1.msra.mxu0 0.0
    %631 = vmatprep.subr.mxu0 0.0
    %632 = vmatpush1.msra.mxu0 0.0
    %633 = vmatprep.subr.mxu0 0.0
    %634 = vmatpush1.msra.mxu0 0.0
    %635 = vmatprep.subr.mxu0 0.0
    %636 = vmatpush1.msra.mxu0 0.0
    %637 = vmatprep.subr.mxu0 0.0
    %638 = vmatpush1.msra.mxu0 0.0
    %639 = vmatprep.subr.mxu0 0.0
    %640 = vmatpush1.msra.mxu0 0.0
    %641 = vmatprep.subr.mxu0 0.0
    %642 = vmatpush1.msra.mxu0 0.0
    %643 = vmatprep.subr.mxu0 0.0
    %644 = vmatpush1.msra.mxu0 0.0
    %645 = vmatprep.subr.mxu0 0.0
    %646 = vmatpush1.msra.mxu0 0.0
    %647 = vmatprep.subr.mxu0 0.0
    %648 = vmatpush1.msra.mxu0 0.0
    %649 = vmatprep.subr.mxu0 0.0
    %650 = vmatpush1.msra.mxu0 0.0
    %651 = vmatprep.subr.mxu0 0.0
    %652 = vmatpush1.msra.mxu0 0.0
    %653 = vmatprep.subr.mxu0 0.0
    %654 = vmatpush1.msra.mxu0 0.0
    %655 = vmatprep.subr.mxu0 0.0
    %656 = vmatpush1.msra.mxu0 0.0
    %657 = vmatprep.mubr.f32.mxu0 0.0
    %658 = vmatmul.mubr.f32.gmra.mrb[0].mxu0 %v591
    %v659 = vpop.f32.mrb[0].mxu0
    %v660 = vadd.f32 0.0, %v659
    %v661 = vpop.f32.mrb[0].mxu0
    %662 = vdwg.mxu0
    %v663 = vadd.f32 %v587, %v660
    %v664 = vxor.u32 %v663, 2147483648
    %v665 = vmul.f32 %v664, 1.442695
    %v666 = vpow.pop %v665
    %v667 = vadd.f32 %v666, 1.0
    %v668 = vrcp.pop %v667
    %v669 = vmul.f32 1.0, %v668
    %v670 = vtanh.pop %v663
    %v671 = vmul.f32 %v669, %v586
    %673 = vrot.lane.b32.xlu0 %v670, 64
    %v674 = vpop.permute.xlu0 %673
    %v676 = vmul.f32 %v669, %v674
    %678 = vrot.lane.b32.xlu0 %v676, 32
    %v679 = vpop.permute.xlu0 %678
    %v681 = vadd.f32 %v671, %v679
    %v682 = vtanh.pop %v681
    %684 = vrot.lane.b32.xlu0 %v682, 64
    %v685 = vpop.permute.xlu0 %684
    %v687 = vmul.f32 %v669, %v685
    %vm688 = vcmp.gt.s32.totalorder %v147, 4
    %v689 = vsel %vm688, %v687, 0.0
    %691 = vrot.lane.b32.xlu0 %v689, 32
    %v692 = vpop.permute.xlu0 %691
    %s694 = scalar_lea.vmem [#allocation3], 16
    %695 = vst.msk [vmem:[%s694] sm:$0xf] %vm254, %v692
    %v696 = vsel %vm688, %v687, %v585
    %v697 = vsel %vm688, %v681, %v586
    %v698 = vld [vmem:[#allocation2 + $0x14] sm:$0xf]
    %700 = vrot.lane.b32.xlu0 %v696, 32
    %v701 = vpop.permute.xlu0 %700
    %v702 = vsel %vm149, %v701, 0
    %704 = vmatprep.subr.mxu0 0.0
    %705 = vmatpush1.msra.mxu0 %v140
    %706 = vmatprep.subr.mxu0 0.0
    %707 = vmatpush1.msra.mxu0 %v141
    %708 = vmatprep.subr.mxu0 0.0
    %709 = vmatpush1.msra.mxu0 %v142
    %710 = vmatprep.subr.mxu0 0.0
    %711 = vmatpush1.msra.mxu0 %v143
    %712 = vmatprep.subr.mxu0 0.0
    %713 = vmatpush1.msra.mxu0 0.0
    %714 = vmatprep.subr.mxu0 0.0
    %715 = vmatpush1.msra.mxu0 0.0
    %716 = vmatprep.subr.mxu0 0.0
    %717 = vmatpush1.msra.mxu0 0.0
    %718 = vmatprep.subr.mxu0 0.0
    %719 = vmatpush1.msra.mxu0 0.0
    %720 = vmatprep.subr.mxu0 0.0
    %721 = vmatpush1.msra.mxu0 0.0
    %722 = vmatprep.subr.mxu0 0.0
    %723 = vmatpush1.msra.mxu0 0.0
    %724 = vmatprep.subr.mxu0 0.0
    %725 = vmatpush1.msra.mxu0 0.0
    %726 = vmatprep.subr.mxu0 0.0
    %727 = vmatpush1.msra.mxu0 0.0
    %728 = vmatprep.subr.mxu0 0.0
    %729 = vmatpush1.msra.mxu0 0.0
    %730 = vmatprep.subr.mxu0 0.0
    %731 = vmatpush1.msra.mxu0 0.0
    %732 = vmatprep.subr.mxu0 0.0
    %733 = vmatpush1.msra.mxu0 0.0
    %734 = vmatprep.subr.mxu0 0.0
    %735 = vmatpush1.msra.mxu0 0.0
    %736 = vmatprep.subr.mxu0 0.0
    %737 = vmatpush1.msra.mxu0 0.0
    %738 = vmatprep.subr.mxu0 0.0
    %739 = vmatpush1.msra.mxu0 0.0
    %740 = vmatprep.subr.mxu0 0.0
    %741 = vmatpush1.msra.mxu0 0.0
    %742 = vmatprep.subr.mxu0 0.0
    %743 = vmatpush1.msra.mxu0 0.0
    %744 = vmatprep.subr.mxu0 0.0
    %745 = vmatpush1.msra.mxu0 0.0
    %746 = vmatprep.subr.mxu0 0.0
    %747 = vmatpush1.msra.mxu0 0.0
    %748 = vmatprep.subr.mxu0 0.0
    %749 = vmatpush1.msra.mxu0 0.0
    %750 = vmatprep.subr.mxu0 0.0
    %751 = vmatpush1.msra.mxu0 0.0
    %752 = vmatprep.subr.mxu0 0.0
    %753 = vmatpush1.msra.mxu0 0.0
    %754 = vmatprep.subr.mxu0 0.0
    %755 = vmatpush1.msra.mxu0 0.0
    %756 = vmatprep.subr.mxu0 0.0
    %757 = vmatpush1.msra.mxu0 0.0
    %758 = vmatprep.subr.mxu0 0.0
    %759 = vmatpush1.msra.mxu0 0.0
    %760 = vmatprep.subr.mxu0 0.0
    %761 = vmatpush1.msra.mxu0 0.0
    %762 = vmatprep.subr.mxu0 0.0
    %763 = vmatpush1.msra.mxu0 0.0
    %764 = vmatprep.subr.mxu0 0.0
    %765 = vmatpush1.msra.mxu0 0.0
    %766 = vmatprep.subr.mxu0 0.0
    %767 = vmatpush1.msra.mxu0 0.0
    %768 = vmatprep.mubr.f32.mxu0 0.0
    %769 = vmatmul.mubr.f32.gmra.mrb[0].mxu0 %v702
    %v770 = vpop.f32.mrb[0].mxu0
    %v771 = vadd.f32 0.0, %v770
    %v772 = vpop.f32.mrb[0].mxu0
    %773 = vdwg.mxu0
    %v774 = vadd.f32 %v698, %v771
    %v775 = vxor.u32 %v774, 2147483648
    %v776 = vmul.f32 %v775, 1.442695
    %v777 = vpow.pop %v776
    %v778 = vadd.f32 %v777, 1.0
    %v779 = vrcp.pop %v778
    %v780 = vmul.f32 1.0, %v779
    %v781 = vtanh.pop %v774
    %v782 = vmul.f32 %v780, %v697
    %784 = vrot.lane.b32.xlu0 %v781, 64
    %v785 = vpop.permute.xlu0 %784
    %v787 = vmul.f32 %v780, %v785
    %789 = vrot.lane.b32.xlu0 %v787, 32
    %v790 = vpop.permute.xlu0 %789
    %v792 = vadd.f32 %v782, %v790
    %v793 = vtanh.pop %v792
    %795 = vrot.lane.b32.xlu0 %v793, 64
    %v796 = vpop.permute.xlu0 %795
    %v798 = vmul.f32 %v780, %v796
    %vm799 = vcmp.gt.s32.totalorder %v147, 5
    %v800 = vsel %vm799, %v798, 0.0
    %802 = vrot.lane.b32.xlu0 %v800, 32
    %v803 = vpop.permute.xlu0 %802
    %s805 = scalar_lea.vmem [#allocation3], 20
    %806 = vst.msk [vmem:[%s805] sm:$0xf] %vm254, %v803
    %v807 = vsel %vm799, %v798, %v696
    %v808 = vsel %vm799, %v792, %v697
    %v809 = vld [vmem:[#allocation2 + $0x18] sm:$0xf]
    %811 = vrot.lane.b32.xlu0 %v807, 32
    %v812 = vpop.permute.xlu0 %811
    %v813 = vsel %vm149, %v812, 0
    %815 = vmatprep.subr.mxu0 0.0
    %816 = vmatpush1.msra.mxu0 %v140
    %817 = vmatprep.subr.mxu0 0.0
    %818 = vmatpush1.msra.mxu0 %v141
    %819 = vmatprep.subr.mxu0 0.0
    %820 = vmatpush1.msra.mxu0 %v142
    %821 = vmatprep.subr.mxu0 0.0
    %822 = vmatpush1.msra.mxu0 %v143
    %823 = vmatprep.subr.mxu0 0.0
    %824 = vmatpush1.msra.mxu0 0.0
    %825 = vmatprep.subr.mxu0 0.0
    %826 = vmatpush1.msra.mxu0 0.0
    %827 = vmatprep.subr.mxu0 0.0
    %828 = vmatpush1.msra.mxu0 0.0
    %829 = vmatprep.subr.mxu0 0.0
    %830 = vmatpush1.msra.mxu0 0.0
    %831 = vmatprep.subr.mxu0 0.0
    %832 = vmatpush1.msra.mxu0 0.0
    %833 = vmatprep.subr.mxu0 0.0
    %834 = vmatpush1.msra.mxu0 0.0
    %835 = vmatprep.subr.mxu0 0.0
    %836 = vmatpush1.msra.mxu0 0.0
    %837 = vmatprep.subr.mxu0 0.0
    %838 = vmatpush1.msra.mxu0 0.0
    %839 = vmatprep.subr.mxu0 0.0
    %840 = vmatpush1.msra.mxu0 0.0
    %841 = vmatprep.subr.mxu0 0.0
    %842 = vmatpush1.msra.mxu0 0.0
    %843 = vmatprep.subr.mxu0 0.0
    %844 = vmatpush1.msra.mxu0 0.0
    %845 = vmatprep.subr.mxu0 0.0
    %846 = vmatpush1.msra.mxu0 0.0
    %847 = vmatprep.subr.mxu0 0.0
    %848 = vmatpush1.msra.mxu0 0.0
    %849 = vmatprep.subr.mxu0 0.0
    %850 = vmatpush1.msra.mxu0 0.0
    %851 = vmatprep.subr.mxu0 0.0
    %852 = vmatpush1.msra.mxu0 0.0
    %853 = vmatprep.subr.mxu0 0.0
    %854 = vmatpush1.msra.mxu0 0.0
    %855 = vmatprep.subr.mxu0 0.0
    %856 = vmatpush1.msra.mxu0 0.0
    %857 = vmatprep.subr.mxu0 0.0
    %858 = vmatpush1.msra.mxu0 0.0
    %859 = vmatprep.subr.mxu0 0.0
    %860 = vmatpush1.msra.mxu0 0.0
    %861 = vmatprep.subr.mxu0 0.0
    %862 = vmatpush1.msra.mxu0 0.0
    %863 = vmatprep.subr.mxu0 0.0
    %864 = vmatpush1.msra.mxu0 0.0
    %865 = vmatprep.subr.mxu0 0.0
    %866 = vmatpush1.msra.mxu0 0.0
    %867 = vmatprep.subr.mxu0 0.0
    %868 = vmatpush1.msra.mxu0 0.0
    %869 = vmatprep.subr.mxu0 0.0
    %870 = vmatpush1.msra.mxu0 0.0
    %871 = vmatprep.subr.mxu0 0.0
    %872 = vmatpush1.msra.mxu0 0.0
    %873 = vmatprep.subr.mxu0 0.0
    %874 = vmatpush1.msra.mxu0 0.0
    %875 = vmatprep.subr.mxu0 0.0
    %876 = vmatpush1.msra.mxu0 0.0
    %877 = vmatprep.subr.mxu0 0.0
    %878 = vmatpush1.msra.mxu0 0.0
    %879 = vmatprep.mubr.f32.mxu0 0.0
    %880 = vmatmul.mubr.f32.gmra.mrb[0].mxu0 %v813
    %v881 = vpop.f32.mrb[0].mxu0
    %v882 = vadd.f32 0.0, %v881
    %v883 = vpop.f32.mrb[0].mxu0
    %884 = vdwg.mxu0
    %v885 = vadd.f32 %v809, %v882
    %v886 = vxor.u32 %v885, 2147483648
    %v887 = vmul.f32 %v886, 1.442695
    %v888 = vpow.pop %v887
    %v889 = vadd.f32 %v888, 1.0
    %v890 = vrcp.pop %v889
    %v891 = vmul.f32 1.0, %v890
    %v892 = vtanh.pop %v885
    %v893 = vmul.f32 %v891, %v808
    %895 = vrot.lane.b32.xlu0 %v892, 64
    %v896 = vpop.permute.xlu0 %895
    %v898 = vmul.f32 %v891, %v896
    %900 = vrot.lane.b32.xlu0 %v898, 32
    %v901 = vpop.permute.xlu0 %900
    %v903 = vadd.f32 %v893, %v901
    %v904 = vtanh.pop %v903
    %906 = vrot.lane.b32.xlu0 %v904, 64
    %v907 = vpop.permute.xlu0 %906
    %v909 = vmul.f32 %v891, %v907
    %vm910 = vcmp.gt.s32.totalorder %v147, 6
    %v911 = vsel %vm910, %v909, 0.0
    %913 = vrot.lane.b32.xlu0 %v911, 32
    %v914 = vpop.permute.xlu0 %913
    %s916 = scalar_lea.vmem [#allocation3], 24
    %917 = vst.msk [vmem:[%s916] sm:$0xf] %vm254, %v914
    %v918 = vsel %vm910, %v909, %v807
    %v919 = vsel %vm910, %v903, %v808
    %v920 = vld [vmem:[#allocation2 + $0x1c] sm:$0xf]
    %922 = vrot.lane.b32.xlu0 %v918, 32
    %v923 = vpop.permute.xlu0 %922
    %v924 = vsel %vm149, %v923, 0
    %926 = vmatprep.subr.mxu0 0.0
    %927 = vmatpush1.msra.mxu0 %v140
    %928 = vmatprep.subr.mxu0 0.0
    %929 = vmatpush1.msra.mxu0 %v141
    %930 = vmatprep.subr.mxu0 0.0
    %931 = vmatpush1.msra.mxu0 %v142
    %932 = vmatprep.subr.mxu0 0.0
    %933 = vmatpush1.msra.mxu0 %v143
    %934 = vmatprep.subr.mxu0 0.0
    %935 = vmatpush1.msra.mxu0 0.0
    %936 = vmatprep.subr.mxu0 0.0
    %937 = vmatpush1.msra.mxu0 0.0
    %938 = vmatprep.subr.mxu0 0.0
    %939 = vmatpush1.msra.mxu0 0.0
    %940 = vmatprep.subr.mxu0 0.0
    %941 = vmatpush1.msra.mxu0 0.0
    %942 = vmatprep.subr.mxu0 0.0
    %943 = vmatpush1.msra.mxu0 0.0
    %944 = vmatprep.subr.mxu0 0.0
    %945 = vmatpush1.msra.mxu0 0.0
    %946 = vmatprep.subr.mxu0 0.0
    %947 = vmatpush1.msra.mxu0 0.0
    %948 = vmatprep.subr.mxu0 0.0
    %949 = vmatpush1.msra.mxu0 0.0
    %950 = vmatprep.subr.mxu0 0.0
    %951 = vmatpush1.msra.mxu0 0.0
    %952 = vmatprep.subr.mxu0 0.0
    %953 = vmatpush1.msra.mxu0 0.0
    %954 = vmatprep.subr.mxu0 0.0
    %955 = vmatpush1.msra.mxu0 0.0
    %956 = vmatprep.subr.mxu0 0.0
    %957 = vmatpush1.msra.mxu0 0.0
    %958 = vmatprep.subr.mxu0 0.0
    %959 = vmatpush1.msra.mxu0 0.0
    %960 = vmatprep.subr.mxu0 0.0
    %961 = vmatpush1.msra.mxu0 0.0
    %962 = vmatprep.subr.mxu0 0.0
    %963 = vmatpush1.msra.mxu0 0.0
    %964 = vmatprep.subr.mxu0 0.0
    %965 = vmatpush1.msra.mxu0 0.0
    %966 = vmatprep.subr.mxu0 0.0
    %967 = vmatpush1.msra.mxu0 0.0
    %968 = vmatprep.subr.mxu0 0.0
    %969 = vmatpush1.msra.mxu0 0.0
    %970 = vmatprep.subr.mxu0 0.0
    %971 = vmatpush1.msra.mxu0 0.0
    %972 = vmatprep.subr.mxu0 0.0
    %973 = vmatpush1.msra.mxu0 0.0
    %974 = vmatprep.subr.mxu0 0.0
    %975 = vmatpush1.msra.mxu0 0.0
    %976 = vmatprep.subr.mxu0 0.0
    %977 = vmatpush1.msra.mxu0 0.0
    %978 = vmatprep.subr.mxu0 0.0
    %979 = vmatpush1.msra.mxu0 0.0
    %980 = vmatprep.subr.mxu0 0.0
    %981 = vmatpush1.msra.mxu0 0.0
    %982 = vmatprep.subr.mxu0 0.0
    %983 = vmatpush1.msra.mxu0 0.0
    %984 = vmatprep.subr.mxu0 0.0
    %985 = vmatpush1.msra.mxu0 0.0
    %986 = vmatprep.subr.mxu0 0.0
    %987 = vmatpush1.msra.mxu0 0.0
    %988 = vmatprep.subr.mxu0 0.0
    %989 = vmatpush1.msra.mxu0 0.0
    %990 = vmatprep.mubr.f32.mxu0 0.0
    %991 = vmatmul.mubr.f32.gmra.mrb[0].mxu0 %v924
    %v992 = vpop.f32.mrb[0].mxu0
    %v993 = vadd.f32 0.0, %v992
    %v994 = vpop.f32.mrb[0].mxu0
    %995 = vdwg.mxu0
    %v996 = vadd.f32 %v920, %v993
    %v997 = vxor.u32 %v996, 2147483648
    %v998 = vmul.f32 %v997, 1.442695
    %v999 = vpow.pop %v998
    %v1000 = vadd.f32 %v999, 1.0
    %v1001 = vrcp.pop %v1000
    %v1002 = vmul.f32 1.0, %v1001
    %v1003 = vtanh.pop %v996
    %v1004 = vmul.f32 %v1002, %v919
    %1006 = vrot.lane.b32.xlu0 %v1003, 64
    %v1007 = vpop.permute.xlu0 %1006
    %v1009 = vmul.f32 %v1002, %v1007
    %1011 = vrot.lane.b32.xlu0 %v1009, 32
    %v1012 = vpop.permute.xlu0 %1011
    %v1014 = vadd.f32 %v1004, %v1012
    %v1015 = vtanh.pop %v1014
    %1017 = vrot.lane.b32.xlu0 %v1015, 64
    %v1018 = vpop.permute.xlu0 %1017
    %v1020 = vmul.f32 %v1002, %v1018
    %vm1021 = vcmp.gt.s32.totalorder %v147, 7
    %v1022 = vsel %vm1021, %v1020, 0.0
    %1024 = vrot.lane.b32.xlu0 %v1022, 32
    %v1025 = vpop.permute.xlu0 %1024
    %s1027 = scalar_lea.vmem [#allocation3], 28
    %1028 = vst.msk [vmem:[%s1027] sm:$0xf] %vm254, %v1025
    %v1029 = vsel %vm1021, %v1020, %v918
    %v1030 = vsel %vm1021, %v1014, %v919
    %1032 = vrot.lane.b32.xlu0 %v1029, 32
    %v1033 = vpop.permute.xlu0 %1032
    %1035 = vst.msk [vmem:[#allocation5] sm:$0xf] %vm254, %v1033
    %1037 = vrot.lane.b32.xlu0 %v1030, 96
    %v1038 = vpop.permute.xlu0 %1037
    %1040 = vst.msk [vmem:[#allocation7] sm:$0xf] %vm254, %v1038
    // Predicated region
    $region22: #{rnn_encoder_forward.1} parent=1 // pred_check
      _
    $region23: #{rnn_encoder_forward.1} parent=1 // pred_check_branch
      %1042 = sbr.rel (0) target = $region25
    $region24: #{rnn_encoder_forward.1} parent=1 // pred_region
      %s1044 = ssub.s32 512, 512
      %1045 = vsyncadd [#allocation4], %s1044
      %s1046 = sshll.u32 [#allocation3], 4
      %s1047 = int_to_ptr.vmem [resolvable:$true] %s1046
      %1052 = dma.vmem_to_hbm [thread:$0]  %s1047, 512, %s5, [#allocation4], 64, 64, 4
    $region25: #{rnn_encoder_forward.1} parent=1 // pred_fallthru
      _
    // Predicated region
    $region26: #{rnn_encoder_forward.1} parent=1 // pred_check
      _
    $region27: #{rnn_encoder_forward.1} parent=1 // pred_check_branch
      %1054 = sbr.rel (0) target = $region29
    $region28: #{rnn_encoder_forward.1} parent=1 // pred_region
      %s1056 = ssub.s32 64, 64
      %1057 = vsyncadd [#allocation6], %s1056
      %s1059 = sshll.u32 [#allocation5], 4
      %s1060 = int_to_ptr.vmem [resolvable:$true] %s1059
      %1062 = dma.vmem_to_hbm [thread:$0]  %s1060, 64, %s6, [#allocation6]
    $region29: #{rnn_encoder_forward.1} parent=1 // pred_fallthru
      _
    // Predicated region
    $region30: #{rnn_encoder_forward.1} parent=1 // pred_check
      _
    $region31: #{rnn_encoder_forward.1} parent=1 // pred_check_branch
      %1064 = sbr.rel (0) target = $region33
    $region32: #{rnn_encoder_forward.1} parent=1 // pred_region
      %s1066 = ssub.s32 64, 64
      %1067 = vsyncadd [#allocation6], %s1066
      %s1069 = sshll.u32 [#allocation7], 4
      %s1070 = int_to_ptr.vmem [resolvable:$true] %s1069
      %1072 = dma.vmem_to_hbm [thread:$0]  %s1070, 64, %s7, [#allocation6]
    $region33: #{rnn_encoder_forward.1} parent=1 // pred_fallthru
      _
    // Predicated region
    $region34: #{rnn_encoder_forward.1} parent=1 // pred_check
      _
    $region35: #{rnn_encoder_forward.1} parent=1 // pred_check_branch
      %1074 = sbr.rel (0) target = $region37
    $region36: #{rnn_encoder_forward.1} parent=1 // pred_region
      %1075 = dma.done [#allocation4], 512
    $region37: #{rnn_encoder_forward.1} parent=1 // pred_fallthru
      _
    // Predicated region
    $region38: #{rnn_encoder_forward.1} parent=1 // pred_check
      _
    $region39: #{rnn_encoder_forward.1} parent=1 // pred_check_branch
      %1077 = sbr.rel (0) target = $region41
    $region40: #{rnn_encoder_forward.1} parent=1 // pred_region
      %1078 = dma.done [#allocation6], 64
    $region41: #{rnn_encoder_forward.1} parent=1 // pred_fallthru
      _
    // Predicated region
    $region42: #{rnn_encoder_forward.1} parent=1 // pred_check
      _
    $region43: #{rnn_encoder_forward.1} parent=1 // pred_check_branch
      %1080 = sbr.rel (0) target = $region45
    $region44: #{rnn_encoder_forward.1} parent=1 // pred_region
      %1081 = dma.done [#allocation6], 64
    $region45: #{rnn_encoder_forward.1} parent=1 // pred_fallthru
      _
    %1082 = vsyncpa [#allocation4], 1
    %1083 = vsyncpa [#allocation6], 1

</llo_original>
